<compile_context>
chip_gen: v5e
topology: v5e:2x2
jax: 0.10.0
libtpu: 0.0.40
codegen_flags: <defaults>
</compile_context>

<pallas_src>
import jax
import jax.numpy as jnp
import numpy as np
from jax.experimental import pallas as pl
from jax.experimental.pallas import tpu as pltpu


def icm_kernel(
    # per batch tile
    am_ref,                                   # (tb, 2) f32: [:,0]=act(float), [:,1]=mask
    curr_ref, next_ref,                       # (tb, S) f32 observations
    ew1, eb1, ew2, eb2, ew3, eb3,             # encoder (weights bf16, biases f32)
    fw1a, fw1b, fb1, fw2, fb2,                # forward model (act-column row split out)
    # output
    intr_ref,                                 # (1, tb) lane-dense per-sample intrinsic reward
):
    f32 = jnp.float32

    def dot(a, w_ref):
        # Matmul operands in the weight dtype (bf16 by default), fp32 accumulate.
        return jnp.dot(a.astype(w_ref.dtype), w_ref[...], preferred_element_type=f32)

    def swish(x):
        # x * sigmoid(x) == x * 0.5 * (1 + tanh(x/2)): single EUP op per element.
        return x * (0.5 * jnp.tanh(0.5 * x) + 0.5)

    tb = curr_ref.shape[0]

    # ---- shared encoder: stack curr rows then next rows in VMEM, encode once
    #      with M = 2*tb (no HBM-side concat/cast needed). ----
    x = jnp.concatenate([curr_ref[...], next_ref[...]], axis=0)        # (2*tb, S) f32
    h = swish(dot(x, ew1) + eb1[...])
    h = swish(dot(h, ew2) + eb2[...])
    enc = swish(dot(h, ew3) + eb3[...])                                # (2*tb, H) f32
    curr_enc = enc[:tb, :]
    next_enc = enc[tb:, :]

    act_f = am_ref[:, 0:1]                                             # (tb, 1) f32
    mask = am_ref[:, 1:2]                                              # (tb, 1) f32

    # NOTE: the inverse branch is intentionally absent: for action_dim == 1 (the
    # only shape-consistent case of the PyTorch module) its cross-entropy loss is
    # identically 0, so it is pure dead compute; inv_loss is emitted as 0 in the
    # wrapper.

    # ---- forward model: cat([act, curr_enc]) @ W == act * w_row0 + curr_enc @ W_rest ----
    h_fwd = swish(act_f * fw1a[...] + dot(curr_enc, fw1b) + fb1[...])
    pred = dot(h_fwd, fw2) + fb2[...]                                  # (tb, H)
    diff = pred - next_enc
    sq = diff * diff * mask                                            # mask folded in pre-reduce
    h_dim = sq.shape[1]
    scale_row = jnp.full((1, h_dim), 0.5 / h_dim, dtype=f32)
    # Lane-dense per-sample reduction: (1,H) . (tb,H)^T -> (1, tb); batch on lanes,
    # avoids masked 1-lane stores.
    intr_ref[...] = jnp.einsum("ih,bh->ib", scale_row, sq, preferred_element_type=f32)


def init_params(key, state_dim, action_dim, n_latent_var):
    S, A, H = state_dim, action_dim, n_latent_var
    shapes = {
        "enc_w1": (S, H), "enc_b1": (1, H),
        "enc_w2": (H, H), "enc_b2": (1, H),
        "enc_w3": (H, H), "enc_b3": (1, H),
        "inv_w1": (2 * H, H), "inv_b1": (1, H),
        "inv_w2": (H, A), "inv_b2": (1, A),
        "fwd_w1": (H + A, H), "fwd_b1": (1, H),   # forward pass feeds 1 + H columns (needs A == 1)
        "fwd_w2": (H, H), "fwd_b2": (1, H),
    }
    keys = jax.random.split(key, len(shapes))
    return {
        name: (jax.random.normal(k, shp, jnp.float32) * 0.1)
        for k, (name, shp) in zip(keys, shapes.items())
    }


def icm_forward(act, curr_obs, next_obs, mask, params, *, tb=512,
                matmul_dtype=jnp.bfloat16):
    """Pallas-backed ICM forward. Returns (intr_reward (B,), inv_loss, forw_loss)."""
    B, S = curr_obs.shape
    H = params["enc_b1"].shape[-1]
    A = params["inv_b2"].shape[-1]
    # Inherited PyTorch constraint: forward_model only shape-consistent for action_dim == 1.
    assert params["fwd_w1"].shape[0] == H + 1 and A == 1, (
        "ICM forward model requires action_dim == 1 (as in the PyTorch module)")

    # Batch tile: multiple of 128 keeps the lane-dense intr output block legal and
    # rows a multiple of the sublane tile; clamp so tiny batches don't over-pad.
    # tb=512 default: double-buffered f32 obs tiles + the (2*tb, H) f32
    # intermediates stay well inside v7x's 32 MiB scoped-VMEM default; sweep
    # 256/512/1024 (1024-2048 is fine on v5e/v6e's 128 MiB VMEM).
    tb = max(128, min(int(tb), pl.cdiv(B, 128) * 128))
    tb = (tb // 128) * 128
    Bp = pl.cdiv(B, tb) * tb
    G = Bp // tb
    pad = Bp - B

    f32 = jnp.float32
    # Pack act (as float; only used elementwise in the forward model) and mask
    # into a single tiny (B, 2) input -> one small DMA per step instead of two.
    am = jnp.stack([act.astype(f32), mask.astype(f32)], axis=1)        # (B, 2)
    curr_p = curr_obs.astype(f32)
    next_p = next_obs.astype(f32)
    if pad:
        # Zero-pad only the ragged tail (no-op when B is a multiple of tb).
        am = jnp.pad(am, ((0, pad), (0, 0)))
        curr_p = jnp.pad(curr_p, ((0, pad), (0, 0)))
        next_p = jnp.pad(next_p, ((0, pad), (0, 0)))

    # Glue: split the forward-model layer-1 weight so the kernel needs no concat:
    fw1a = params["fwd_w1"][:1, :]      # weight row for the act column (elementwise, keep f32)
    fw1b = params["fwd_w1"][1:, :]      # multiplies curr_enc

    w = lambda arr: arr.astype(matmul_dtype)   # MXU operands; biases stay f32
    weights = [
        w(params["enc_w1"]), params["enc_b1"],
        w(params["enc_w2"]), params["enc_b2"],
        w(params["enc_w3"]), params["enc_b3"],
        fw1a, w(fw1b), params["fwd_b1"], w(params["fwd_w2"]), params["fwd_b2"],
    ]

    in_specs = [
        pl.BlockSpec((tb, 2), lambda i: (i, 0)),    # act+mask
        pl.BlockSpec((tb, S), lambda i: (i, 0)),    # curr_obs tile
        pl.BlockSpec((tb, S), lambda i: (i, 0)),    # next_obs tile
    ] + [
        # Weights/biases: full-array blocks, constant index_map -> VMEM-resident
        # across steps.  (If H grows to >=512 in production, consider
        # pipeline_mode=pl.Buffered(1) here to avoid double-buffering them.)
        pl.BlockSpec(arr.shape, lambda i: (0, 0)) for arr in weights
    ]

    # Advisory cost estimate so XLA schedules surrounding ops around the call.
    flops = 4 * Bp * H * (S + 2 * H) + 4 * Bp * H * H + 2 * Bp * H
    transcendentals = 7 * Bp * H
    bytes_accessed = 4 * (2 * Bp * S + 2 * Bp + Bp) + sum(
        int(a.size) * a.dtype.itemsize for a in weights)

    intr = pl.pallas_call(
        icm_kernel,
        out_shape=jax.ShapeDtypeStruct((1, Bp), f32),   # lane-dense (batch on lanes)
        grid=(G,),
        in_specs=in_specs,
        out_specs=pl.BlockSpec((1, tb), lambda i: (0, i)),
        compiler_params=pltpu.CompilerParams(
            # No cross-step carried state -> batch tiles are independent and can
            # be sharded across both TensorCores on v7x.
            dimension_semantics=("parallel",),
        ),
        cost_estimate=pl.CostEstimate(
            flops=int(flops),
            transcendentals=int(transcendentals),
            bytes_accessed=int(bytes_accessed)),
    )(am, curr_p, next_p, *weights)

    intr_reward = intr[0, :B]
    forw_loss = jnp.mean(intr_reward)
    # With action_dim == 1 (asserted above, and the only case the PyTorch forward
    # is shape-consistent for), CrossEntropyLoss over a single logit is exactly 0.
    inv_loss = jnp.zeros((), f32)
    return intr_reward, inv_loss, forw_loss


def icm_reference(act, curr_obs, next_obs, mask, p):
    """Plain-JAX transcription of the PyTorch forward (float32, for correctness check)."""
    def sw(x): return x * jax.nn.sigmoid(x)

    def enc(x):
        h = sw(x @ p["enc_w1"] + p["enc_b1"])
        h = sw(h @ p["enc_w2"] + p["enc_b2"])
        h = sw(h @ p["enc_w3"] + p["enc_b3"])
        return h

    ce_enc, ne_enc = enc(curr_obs), enc(next_obs)
    comb = jnp.concatenate([ce_enc, ne_enc], axis=1)
    h = sw(comb @ p["inv_w1"] + p["inv_b1"])
    logits = h @ p["inv_w2"] + p["inv_b2"]
    logp = jax.nn.log_softmax(logits, axis=1)
    ce = -jnp.take_along_axis(logp, act.reshape(-1, 1).astype(jnp.int32), axis=1)[:, 0]
    inv_loss = jnp.mean(ce * mask)

    x = jnp.concatenate([act.reshape(-1, 1).astype(jnp.float32), ce_enc], axis=1)
    h = sw(x @ p["fwd_w1"] + p["fwd_b1"])
    pred = h @ p["fwd_w2"] + p["fwd_b2"]
    intr = 0.5 * jnp.mean((pred - ne_enc) ** 2, axis=1) * mask
    return intr, inv_loss, jnp.mean(intr)


if __name__ == "__main__":
    B, S, H, A = 8, 16, 32, 1   # batch, state_dim, n_latent_var, action_dim
    key = jax.random.PRNGKey(0)
    kp, k1, k2, k3 = jax.random.split(key, 4)

    params = init_params(kp, S, A, H)
    curr_obs = jax.random.normal(k1, (B, S), jnp.float32)
    next_obs = jax.random.normal(k2, (B, S), jnp.float32)
    mask = (jax.random.uniform(k3, (B,)) > 0.3).astype(jnp.float32)
    act = jnp.zeros((B,), jnp.int32)   # valid class indices in [0, A); A == 1 -> all zeros

    intr, inv_loss, forw_loss = icm_forward(act, curr_obs, next_obs, mask, params)
    jax.block_until_ready((intr, inv_loss, forw_loss))

    intr_r, inv_r, forw_r = icm_reference(act, curr_obs, next_obs, mask, params)
    # bf16 matmul operands (fp32 accumulation) -> bf16-appropriate tolerances.
    assert np.allclose(np.asarray(intr), np.asarray(intr_r), rtol=5e-2, atol=5e-3), (intr, intr_r)
    assert np.allclose(float(inv_loss), float(inv_r), rtol=5e-2, atol=5e-3), (inv_loss, inv_r)
    assert np.allclose(float(forw_loss), float(forw_r), rtol=5e-2, atol=5e-3), (forw_loss, forw_r)

    print("KERNEL_OK")
</pallas_src>

<mosaic_0001>
module attributes {stable_mosaic.version = 11 : i64} {
  func.func @icm_kernel(%arg0: i32, %arg1: memref<128x2xf32, #tpu.memory_space<vmem>>, %arg2: memref<128x16xf32, #tpu.memory_space<vmem>>, %arg3: memref<128x16xf32, #tpu.memory_space<vmem>>, %arg4: memref<16x32xbf16, #tpu.memory_space<vmem>>, %arg5: memref<1x32xf32, #tpu.memory_space<vmem>>, %arg6: memref<32x32xbf16, #tpu.memory_space<vmem>>, %arg7: memref<1x32xf32, #tpu.memory_space<vmem>>, %arg8: memref<32x32xbf16, #tpu.memory_space<vmem>>, %arg9: memref<1x32xf32, #tpu.memory_space<vmem>>, %arg10: memref<1x32xf32, #tpu.memory_space<vmem>>, %arg11: memref<32x32xbf16, #tpu.memory_space<vmem>>, %arg12: memref<1x32xf32, #tpu.memory_space<vmem>>, %arg13: memref<32x32xbf16, #tpu.memory_space<vmem>>, %arg14: memref<1x32xf32, #tpu.memory_space<vmem>>, %arg15: memref<1x128xf32, #tpu.memory_space<vmem>>) attributes {dimension_semantics = [#tpu.dimension_semantics<parallel>], iteration_bounds = array<i64: 1>, scalar_prefetch = 0 : i64, scratch_operands = 0 : i64, tpu.core_type = #tpu.core_type<tc>, window_params = [{transform_indices = @transform_0, window_bounds = array<i64: 128, 2>}, {transform_indices = @transform_1, window_bounds = array<i64: 128, 16>}, {transform_indices = @transform_2, window_bounds = array<i64: 128, 16>}, {pipeline_mode = #tpu.pipeline_mode<synchronous>, transform_indices = @transform_3, window_bounds = array<i64: 16, 32>}, {pipeline_mode = #tpu.pipeline_mode<synchronous>, transform_indices = @transform_4, window_bounds = array<i64: 1, 32>}, {pipeline_mode = #tpu.pipeline_mode<synchronous>, transform_indices = @transform_5, window_bounds = array<i64: 32, 32>}, {pipeline_mode = #tpu.pipeline_mode<synchronous>, transform_indices = @transform_6, window_bounds = array<i64: 1, 32>}, {pipeline_mode = #tpu.pipeline_mode<synchronous>, transform_indices = @transform_7, window_bounds = array<i64: 32, 32>}, {pipeline_mode = #tpu.pipeline_mode<synchronous>, transform_indices = @transform_8, window_bounds = array<i64: 1, 32>}, {pipeline_mode = #tpu.pipeline_mode<synchronous>, transform_indices = @transform_9, window_bounds = array<i64: 1, 32>}, {pipeline_mode = #tpu.pipeline_mode<synchronous>, transform_indices = @transform_10, window_bounds = array<i64: 32, 32>}, {pipeline_mode = #tpu.pipeline_mode<synchronous>, transform_indices = @transform_11, window_bounds = array<i64: 1, 32>}, {pipeline_mode = #tpu.pipeline_mode<synchronous>, transform_indices = @transform_12, window_bounds = array<i64: 32, 32>}, {pipeline_mode = #tpu.pipeline_mode<synchronous>, transform_indices = @transform_13, window_bounds = array<i64: 1, 32>}, {transform_indices = @transform_14, window_bounds = array<i64: 1, 128>}]} {
    %c0 = arith.constant 0 : index
    %c0_0 = arith.constant 0 : index
    %0 = vector.load %arg2[%c0, %c0_0] : memref<128x16xf32, #tpu.memory_space<vmem>>, vector<128x16xf32>
    %c0_1 = arith.constant 0 : index
    %c0_2 = arith.constant 0 : index
    %1 = vector.load %arg3[%c0_1, %c0_2] : memref<128x16xf32, #tpu.memory_space<vmem>>, vector<128x16xf32>
    %2 = tpu.concatenate %0, %1 in 0 : vector<128x16xf32>, vector<128x16xf32> -> vector<256x16xf32>
    %3 = arith.truncf %2 : vector<256x16xf32> to vector<256x16xbf16>
    %c0_3 = arith.constant 0 : index
    %c0_4 = arith.constant 0 : index
    %4 = vector.load %arg4[%c0_3, %c0_4] : memref<16x32xbf16, #tpu.memory_space<vmem>>, vector<16x32xbf16>
    %cst = arith.constant dense<0.000000e+00> : vector<256x32xf32>
    %5 = tpu.matmul %3, %4, %cst {dimension_numbers = #tpu.dot_dimension_numbers<[1], [0], [0], [1], [0, 0, 1, 1], [], []>} : vector<256x16xbf16>, vector<16x32xbf16>, vector<256x32xf32> -> vector<256x32xf32>
    %c0_5 = arith.constant 0 : index
    %c0_6 = arith.constant 0 : index
    %6 = vector.load %arg5[%c0_5, %c0_6] : memref<1x32xf32, #tpu.memory_space<vmem>>, vector<1x32xf32>
    %7 = vector.broadcast %6 : vector<1x32xf32> to vector<256x32xf32>
    %8 = arith.addf %5, %7 : vector<256x32xf32>
    %cst_7 = arith.constant 5.000000e-01 : f32
    %9 = vector.broadcast %cst_7 : f32 to vector<256x32xf32>
    %10 = arith.mulf %9, %8 : vector<256x32xf32>
    %11 = math.tanh %10 : vector<256x32xf32>
    %cst_8 = arith.constant 5.000000e-01 : f32
    %12 = vector.broadcast %cst_8 : f32 to vector<256x32xf32>
    %13 = arith.mulf %12, %11 : vector<256x32xf32>
    %cst_9 = arith.constant 5.000000e-01 : f32
    %14 = vector.broadcast %cst_9 : f32 to vector<256x32xf32>
    %15 = arith.addf %13, %14 : vector<256x32xf32>
    %16 = arith.mulf %8, %15 : vector<256x32xf32>
    %17 = arith.truncf %16 : vector<256x32xf32> to vector<256x32xbf16>
    %c0_10 = arith.constant 0 : index
    %c0_11 = arith.constant 0 : index
    %18 = vector.load %arg6[%c0_10, %c0_11] : memref<32x32xbf16, #tpu.memory_space<vmem>>, vector<32x32xbf16>
    %cst_12 = arith.constant dense<0.000000e+00> : vector<256x32xf32>
    %19 = tpu.matmul %17, %18, %cst_12 {dimension_numbers = #tpu.dot_dimension_numbers<[1], [0], [0], [1], [0, 0, 1, 1], [], []>} : vector<256x32xbf16>, vector<32x32xbf16>, vector<256x32xf32> -> vector<256x32xf32>
    %c0_13 = arith.constant 0 : index
    %c0_14 = arith.constant 0 : index
    %20 = vector.load %arg7[%c0_13, %c0_14] : memref<1x32xf32, #tpu.memory_space<vmem>>, vector<1x32xf32>
    %21 = vector.broadcast %20 : vector<1x32xf32> to vector<256x32xf32>
    %22 = arith.addf %19, %21 : vector<256x32xf32>
    %cst_15 = arith.constant 5.000000e-01 : f32
    %23 = vector.broadcast %cst_15 : f32 to vector<256x32xf32>
    %24 = arith.mulf %23, %22 : vector<256x32xf32>
    %25 = math.tanh %24 : vector<256x32xf32>
    %cst_16 = arith.constant 5.000000e-01 : f32
    %26 = vector.broadcast %cst_16 : f32 to vector<256x32xf32>
    %27 = arith.mulf %26, %25 : vector<256x32xf32>
    %cst_17 = arith.constant 5.000000e-01 : f32
    %28 = vector.broadcast %cst_17 : f32 to vector<256x32xf32>
    %29 = arith.addf %27, %28 : vector<256x32xf32>
    %30 = arith.mulf %22, %29 : vector<256x32xf32>
    %31 = arith.truncf %30 : vector<256x32xf32> to vector<256x32xbf16>
    %c0_18 = arith.constant 0 : index
    %c0_19 = arith.constant 0 : index
    %32 = vector.load %arg8[%c0_18, %c0_19] : memref<32x32xbf16, #tpu.memory_space<vmem>>, vector<32x32xbf16>
    %cst_20 = arith.constant dense<0.000000e+00> : vector<256x32xf32>
    %33 = tpu.matmul %31, %32, %cst_20 {dimension_numbers = #tpu.dot_dimension_numbers<[1], [0], [0], [1], [0, 0, 1, 1], [], []>} : vector<256x32xbf16>, vector<32x32xbf16>, vector<256x32xf32> -> vector<256x32xf32>
    %c0_21 = arith.constant 0 : index
    %c0_22 = arith.constant 0 : index
    %34 = vector.load %arg9[%c0_21, %c0_22] : memref<1x32xf32, #tpu.memory_space<vmem>>, vector<1x32xf32>
    %35 = vector.broadcast %34 : vector<1x32xf32> to vector<256x32xf32>
    %36 = arith.addf %33, %35 : vector<256x32xf32>
    %cst_23 = arith.constant 5.000000e-01 : f32
    %37 = vector.broadcast %cst_23 : f32 to vector<256x32xf32>
    %38 = arith.mulf %37, %36 : vector<256x32xf32>
    %39 = math.tanh %38 : vector<256x32xf32>
    %cst_24 = arith.constant 5.000000e-01 : f32
    %40 = vector.broadcast %cst_24 : f32 to vector<256x32xf32>
    %41 = arith.mulf %40, %39 : vector<256x32xf32>
    %cst_25 = arith.constant 5.000000e-01 : f32
    %42 = vector.broadcast %cst_25 : f32 to vector<256x32xf32>
    %43 = arith.addf %41, %42 : vector<256x32xf32>
    %44 = arith.mulf %36, %43 : vector<256x32xf32>
    %45 = vector.extract_strided_slice %44 {offsets = [0, 0], sizes = [128, 32], strides = [1, 1]} : vector<256x32xf32> to vector<128x32xf32>
    %46 = vector.extract_strided_slice %44 {offsets = [128, 0], sizes = [128, 32], strides = [1, 1]} : vector<256x32xf32> to vector<128x32xf32>
    %c0_26 = arith.constant 0 : index
    %c0_27 = arith.constant 0 : index
    %47 = vector.load %arg1[%c0_26, %c0_27] : memref<128x2xf32, #tpu.memory_space<vmem>>, vector<128x1xf32>
    %c0_28 = arith.constant 0 : index
    %c1 = arith.constant 1 : index
    %48 = vector.load %arg1[%c0_28, %c1] : memref<128x2xf32, #tpu.memory_space<vmem>>, vector<128x1xf32>
    %c0_29 = arith.constant 0 : index
    %c0_30 = arith.constant 0 : index
    %49 = vector.load %arg10[%c0_29, %c0_30] : memref<1x32xf32, #tpu.memory_space<vmem>>, vector<1x32xf32>
    %50 = vector.broadcast %47 : vector<128x1xf32> to vector<128x32xf32>
    %51 = vector.broadcast %49 : vector<1x32xf32> to vector<128x32xf32>
    %52 = arith.mulf %50, %51 : vector<128x32xf32>
    %53 = arith.truncf %45 : vector<128x32xf32> to vector<128x32xbf16>
    %c0_31 = arith.constant 0 : index
    %c0_32 = arith.constant 0 : index
    %54 = vector.load %arg11[%c0_31, %c0_32] : memref<32x32xbf16, #tpu.memory_space<vmem>>, vector<32x32xbf16>
    %cst_33 = arith.constant dense<0.000000e+00> : vector<128x32xf32>
    %55 = tpu.matmul %53, %54, %cst_33 {dimension_numbers = #tpu.dot_dimension_numbers<[1], [0], [0], [1], [0, 0, 1, 1], [], []>} : vector<128x32xbf16>, vector<32x32xbf16>, vector<128x32xf32> -> vector<128x32xf32>
    %56 = arith.addf %52, %55 : vector<128x32xf32>
    %c0_34 = arith.constant 0 : index
    %c0_35 = arith.constant 0 : index
    %57 = vector.load %arg12[%c0_34, %c0_35] : memref<1x32xf32, #tpu.memory_space<vmem>>, vector<1x32xf32>
    %58 = vector.broadcast %57 : vector<1x32xf32> to vector<128x32xf32>
    %59 = arith.addf %56, %58 : vector<128x32xf32>
    %cst_36 = arith.constant 5.000000e-01 : f32
    %60 = vector.broadcast %cst_36 : f32 to vector<128x32xf32>
    %61 = arith.mulf %60, %59 : vector<128x32xf32>
    %62 = math.tanh %61 : vector<128x32xf32>
    %cst_37 = arith.constant 5.000000e-01 : f32
    %63 = vector.broadcast %cst_37 : f32 to vector<128x32xf32>
    %64 = arith.mulf %63, %62 : vector<128x32xf32>
    %cst_38 = arith.constant 5.000000e-01 : f32
    %65 = vector.broadcast %cst_38 : f32 to vector<128x32xf32>
    %66 = arith.addf %64, %65 : vector<128x32xf32>
    %67 = arith.mulf %59, %66 : vector<128x32xf32>
    %68 = arith.truncf %67 : vector<128x32xf32> to vector<128x32xbf16>
    %c0_39 = arith.constant 0 : index
    %c0_40 = arith.constant 0 : index
    %69 = vector.load %arg13[%c0_39, %c0_40] : memref<32x32xbf16, #tpu.memory_space<vmem>>, vector<32x32xbf16>
    %cst_41 = arith.constant dense<0.000000e+00> : vector<128x32xf32>
    %70 = tpu.matmul %68, %69, %cst_41 {dimension_numbers = #tpu.dot_dimension_numbers<[1], [0], [0], [1], [0, 0, 1, 1], [], []>} : vector<128x32xbf16>, vector<32x32xbf16>, vector<128x32xf32> -> vector<128x32xf32>
    %c0_42 = arith.constant 0 : index
    %c0_43 = arith.constant 0 : index
    %71 = vector.load %arg14[%c0_42, %c0_43] : memref<1x32xf32, #tpu.memory_space<vmem>>, vector<1x32xf32>
    %72 = vector.broadcast %71 : vector<1x32xf32> to vector<128x32xf32>
    %73 = arith.addf %70, %72 : vector<128x32xf32>
    %74 = arith.subf %73, %46 : vector<128x32xf32>
    %75 = arith.mulf %74, %74 : vector<128x32xf32>
    %76 = vector.broadcast %48 : vector<128x1xf32> to vector<128x32xf32>
    %77 = arith.mulf %75, %76 : vector<128x32xf32>
    %cst_44 = arith.constant 1.562500e-02 : f32
    %78 = vector.broadcast %cst_44 : f32 to vector<1x32xf32>
    "tpu.trace_start"() <{level = 10 : i32, message = "ih,bh->ib"}> : () -> ()
    %cst_45 = arith.constant dense<0.000000e+00> : vector<1x128xf32>
    %79 = tpu.matmul %78, %77, %cst_45 {dimension_numbers = #tpu.dot_dimension_numbers<[1], [1], [0], [0], [0, 0, 1, 0], [], []>} : vector<1x32xf32>, vector<128x32xf32>, vector<1x128xf32> -> vector<1x128xf32>
    "tpu.trace_stop"() : () -> ()
    %c0_46 = arith.constant 0 : index
    %c0_47 = arith.constant 0 : index
    %80 = vector.load %arg15[%c0_46, %c0_47] : memref<1x128xf32, #tpu.memory_space<vmem>>, vector<1x128xf32>
    tpu.vector_store %arg15[%c0_46, %c0_47], %79 {strides = array<i32>} : memref<1x128xf32, #tpu.memory_space<vmem>>, vector<1x128xf32>,
    return
  }
  func.func @transform_0(%arg0: i32) -> (i32, i32) {
    %c0_i32 = arith.constant 0 : i32
    %c0_i32_0 = arith.constant 0 : i32
    return %arg0, %c0_i32 : i32, i32
  }
  func.func @transform_1(%arg0: i32) -> (i32, i32) {
    %c0_i32 = arith.constant 0 : i32
    %c0_i32_0 = arith.constant 0 : i32
    return %arg0, %c0_i32 : i32, i32
  }
  func.func @transform_2(%arg0: i32) -> (i32, i32) {
    %c0_i32 = arith.constant 0 : i32
    %c0_i32_0 = arith.constant 0 : i32
    return %arg0, %c0_i32 : i32, i32
  }
  func.func @transform_3(%arg0: i32) -> (i32, i32) {
    %c0_i32 = arith.constant 0 : i32
    %c0_i32_0 = arith.constant 0 : i32
    %c0_i32_1 = arith.constant 0 : i32
    return %c0_i32, %c0_i32_0 : i32, i32
  }
  func.func @transform_4(%arg0: i32) -> (i32, i32) {
    %c0_i32 = arith.constant 0 : i32
    %c0_i32_0 = arith.constant 0 : i32
    %c0_i32_1 = arith.constant 0 : i32
    return %c0_i32, %c0_i32_0 : i32, i32
  }
  func.func @transform_5(%arg0: i32) -> (i32, i32) {
    %c0_i32 = arith.constant 0 : i32
    %c0_i32_0 = arith.constant 0 : i32
    %c0_i32_1 = arith.constant 0 : i32
    return %c0_i32, %c0_i32_0 : i32, i32
  }
  func.func @transform_6(%arg0: i32) -> (i32, i32) {
    %c0_i32 = arith.constant 0 : i32
    %c0_i32_0 = arith.constant 0 : i32
    %c0_i32_1 = arith.constant 0 : i32
    return %c0_i32, %c0_i32_0 : i32, i32
  }
  func.func @transform_7(%arg0: i32) -> (i32, i32) {
    %c0_i32 = arith.constant 0 : i32
    %c0_i32_0 = arith.constant 0 : i32
    %c0_i32_1 = arith.constant 0 : i32
    return %c0_i32, %c0_i32_0 : i32, i32
  }
  func.func @transform_8(%arg0: i32) -> (i32, i32) {
    %c0_i32 = arith.constant 0 : i32
    %c0_i32_0 = arith.constant 0 : i32
    %c0_i32_1 = arith.constant 0 : i32
    return %c0_i32, %c0_i32_0 : i32, i32
  }
  func.func @transform_9(%arg0: i32) -> (i32, i32) {
    %c0_i32 = arith.constant 0 : i32
    %c0_i32_0 = arith.constant 0 : i32
    %c0_i32_1 = arith.constant 0 : i32
    return %c0_i32, %c0_i32_0 : i32, i32
  }
  func.func @transform_10(%arg0: i32) -> (i32, i32) {
    %c0_i32 = arith.constant 0 : i32
    %c0_i32_0 = arith.constant 0 : i32
    %c0_i32_1 = arith.constant 0 : i32
    return %c0_i32, %c0_i32_0 : i32, i32
  }
  func.func @transform_11(%arg0: i32) -> (i32, i32) {
    %c0_i32 = arith.constant 0 : i32
    %c0_i32_0 = arith.constant 0 : i32
    %c0_i32_1 = arith.constant 0 : i32
    return %c0_i32, %c0_i32_0 : i32, i32
  }
  func.func @transform_12(%arg0: i32) -> (i32, i32) {
    %c0_i32 = arith.constant 0 : i32
    %c0_i32_0 = arith.constant 0 : i32
    %c0_i32_1 = arith.constant 0 : i32
    return %c0_i32, %c0_i32_0 : i32, i32
  }
  func.func @transform_13(%arg0: i32) -> (i32, i32) {
    %c0_i32 = arith.constant 0 : i32
    %c0_i32_0 = arith.constant 0 : i32
    %c0_i32_1 = arith.constant 0 : i32
    return %c0_i32, %c0_i32_0 : i32, i32
  }
  func.func @transform_14(%arg0: i32) -> (i32, i32) {
    %c0_i32 = arith.constant 0 : i32
    %c0_i32_0 = arith.constant 0 : i32
    return %c0_i32, %arg0 : i32, i32
  }
}

</mosaic_0001>

<llo_original>
// kernel: tpu_custom_call.1
$region0: #{tpu_custom_call.1}
  #allocation0 [shape = 'u32[]', space=smem, size = 0x4, offset = 0x4, fixed_abs, tag = 'smem constant byte address 0x4 - core index']
  #allocation1 [shape = 'u32[72,128]{1,0:T(1,128)}', space=vmem, size = 0x9000, scoped, tag = 'internal scratch']
  %s0 = inlined_call_operand.vmem [shape: f32[128,2], index: 0, kind: input, shape index: {}]
  %s1 = inlined_call_operand.vmem [shape: f32[128,16], index: 1, kind: input, shape index: {}]
  %s2 = inlined_call_operand.vmem [shape: f32[128,16], index: 2, kind: input, shape index: {}]
  %s3 = inlined_call_operand.vmem [shape: bf16[16,32], index: 3, kind: input, shape index: {}]
  %s4 = inlined_call_operand.vmem [shape: f32[1,32], index: 4, kind: input, shape index: {}]
  %s5 = inlined_call_operand.vmem [shape: bf16[32,32], index: 5, kind: input, shape index: {}]
  %s6 = inlined_call_operand.vmem [shape: f32[1,32], index: 6, kind: input, shape index: {}]
  %s7 = inlined_call_operand.vmem [shape: bf16[32,32], index: 7, kind: input, shape index: {}]
  %s8 = inlined_call_operand.vmem [shape: f32[1,32], index: 8, kind: input, shape index: {}]
  %s9 = inlined_call_operand.vmem [shape: f32[1,32], index: 9, kind: input, shape index: {}]
  %s10 = inlined_call_operand.vmem [shape: bf16[32,32], index: 10, kind: input, shape index: {}]
  %s11 = inlined_call_operand.vmem [shape: f32[1,32], index: 11, kind: input, shape index: {}]
  %s12 = inlined_call_operand.vmem [shape: bf16[32,32], index: 12, kind: input, shape index: {}]
  %s13 = inlined_call_operand.vmem [shape: f32[1,32], index: 13, kind: input, shape index: {}]
  %s14 = inlined_call_operand.hbm [shape: f32[1,128], index: 14, kind: output, shape index: {}]
  %s15 = sld [smem:[#allocation0]]
  $region66: #{tpu_custom_call.1} parent=0
    _
  %s17 = ssub.s32 1, %s15
  %s18 = scalar_select 0, %s17, %s15
  $region1: #{tpu_custom_call.1} parent=0
    #allocation2 [shape = 'u8[512]{0}', space=vmem, size = 0x400, scoped, tag = 'output window, operand 0, single buffered']
    #allocation3 [shape = 's32[1]{0}', space=sflag, size = 0x4, scoped, tag = 'scoped memory for tpu_custom_call.1']
    %19 = vsyncpa [#allocation3], 0
    // Predicated region
    $region2: #{tpu_custom_call.1} parent=1 // pred_check
      _
    $region3: #{tpu_custom_call.1} parent=1 // pred_check_branch
      %21 = sbr.rel (0) target = $region5
    $region4: #{tpu_custom_call.1} parent=1 // pred_region
      _
    $region5: #{tpu_custom_call.1} parent=1 // pred_fallthru
      _
    // Predicated region
    $region6: #{tpu_custom_call.1} parent=1 // pred_check
      _
    $region7: #{tpu_custom_call.1} parent=1 // pred_check_branch
      %23 = sbr.rel (0) target = $region9
    $region8: #{tpu_custom_call.1} parent=1 // pred_region
      _
    $region9: #{tpu_custom_call.1} parent=1 // pred_fallthru
      _
    // Predicated region
    $region10: #{tpu_custom_call.1} parent=1 // pred_check
      _
    $region11: #{tpu_custom_call.1} parent=1 // pred_check_branch
      %25 = sbr.rel (0) target = $region13
    $region12: #{tpu_custom_call.1} parent=1 // pred_region
      _
    $region13: #{tpu_custom_call.1} parent=1 // pred_fallthru
      _
    // Predicated region
    $region14: #{tpu_custom_call.1} parent=1 // pred_check
      _
    $region15: #{tpu_custom_call.1} parent=1 // pred_check_branch
      %27 = sbr.rel (0) target = $region17
    $region16: #{tpu_custom_call.1} parent=1 // pred_region
      _
    $region17: #{tpu_custom_call.1} parent=1 // pred_fallthru
      _
    // Predicated region
    $region18: #{tpu_custom_call.1} parent=1 // pred_check
      _
    $region19: #{tpu_custom_call.1} parent=1 // pred_check_branch
      %29 = sbr.rel (0) target = $region21
    $region20: #{tpu_custom_call.1} parent=1 // pred_region
      _
    $region21: #{tpu_custom_call.1} parent=1 // pred_fallthru
      _
    // Predicated region
    $region22: #{tpu_custom_call.1} parent=1 // pred_check
      _
    $region23: #{tpu_custom_call.1} parent=1 // pred_check_branch
      %31 = sbr.rel (0) target = $region25
    $region24: #{tpu_custom_call.1} parent=1 // pred_region
      _
    $region25: #{tpu_custom_call.1} parent=1 // pred_fallthru
      _
    // Predicated region
    $region26: #{tpu_custom_call.1} parent=1 // pred_check
      _
    $region27: #{tpu_custom_call.1} parent=1 // pred_check_branch
      %33 = sbr.rel (0) target = $region29
    $region28: #{tpu_custom_call.1} parent=1 // pred_region
      _
    $region29: #{tpu_custom_call.1} parent=1 // pred_fallthru
      _
    // Predicated region
    $region30: #{tpu_custom_call.1} parent=1 // pred_check
      _
    $region31: #{tpu_custom_call.1} parent=1 // pred_check_branch
      %35 = sbr.rel (0) target = $region33
    $region32: #{tpu_custom_call.1} parent=1 // pred_region
      _
    $region33: #{tpu_custom_call.1} parent=1 // pred_fallthru
      _
    // Predicated region
    $region34: #{tpu_custom_call.1} parent=1 // pred_check
      _
    $region35: #{tpu_custom_call.1} parent=1 // pred_check_branch
      %37 = sbr.rel (0) target = $region37
    $region36: #{tpu_custom_call.1} parent=1 // pred_region
      _
    $region37: #{tpu_custom_call.1} parent=1 // pred_fallthru
      _
    // Predicated region
    $region38: #{tpu_custom_call.1} parent=1 // pred_check
      _
    $region39: #{tpu_custom_call.1} parent=1 // pred_check_branch
      %39 = sbr.rel (0) target = $region41
    $region40: #{tpu_custom_call.1} parent=1 // pred_region
      _
    $region41: #{tpu_custom_call.1} parent=1 // pred_fallthru
      _
    // Predicated region
    $region42: #{tpu_custom_call.1} parent=1 // pred_check
      _
    $region43: #{tpu_custom_call.1} parent=1 // pred_check_branch
      %41 = sbr.rel (0) target = $region45
    $region44: #{tpu_custom_call.1} parent=1 // pred_region
      _
    $region45: #{tpu_custom_call.1} parent=1 // pred_fallthru
      _
    // Predicated region
    $region46: #{tpu_custom_call.1} parent=1 // pred_check
      _
    $region47: #{tpu_custom_call.1} parent=1 // pred_check_branch
      %43 = sbr.rel (0) target = $region49
    $region48: #{tpu_custom_call.1} parent=1 // pred_region
      _
    $region49: #{tpu_custom_call.1} parent=1 // pred_fallthru
      _
    // Predicated region
    $region50: #{tpu_custom_call.1} parent=1 // pred_check
      _
    $region51: #{tpu_custom_call.1} parent=1 // pred_check_branch
      %45 = sbr.rel (0) target = $region53
    $region52: #{tpu_custom_call.1} parent=1 // pred_region
      _
    $region53: #{tpu_custom_call.1} parent=1 // pred_fallthru
      _
    // Predicated region
    $region54: #{tpu_custom_call.1} parent=1 // pred_check
      _
    $region55: #{tpu_custom_call.1} parent=1 // pred_check_branch
      %47 = sbr.rel (0) target = $region57
    $region56: #{tpu_custom_call.1} parent=1 // pred_region
      _
    $region57: #{tpu_custom_call.1} parent=1 // pred_fallthru
      _
    %v49 = vld [vmem:[%s1] sm:$0xff]
    %v50 = vld [vmem:[%s1 + $0x8] sm:$0xff]
    %v51 = vld [vmem:[%s1 + $0x10] sm:$0xff]
    %v52 = vld [vmem:[%s1 + $0x18] sm:$0xff]
    %v53 = vld [vmem:[%s1 + $0x20] sm:$0xff]
    %v54 = vld [vmem:[%s1 + $0x28] sm:$0xff]
    %v55 = vld [vmem:[%s1 + $0x30] sm:$0xff]
    %v56 = vld [vmem:[%s1 + $0x38] sm:$0xff]
    %v57 = vld [vmem:[%s1 + $0x40] sm:$0xff]
    %v58 = vld [vmem:[%s1 + $0x48] sm:$0xff]
    %v59 = vld [vmem:[%s1 + $0x50] sm:$0xff]
    %v60 = vld [vmem:[%s1 + $0x58] sm:$0xff]
    %v61 = vld [vmem:[%s1 + $0x60] sm:$0xff]
    %v62 = vld [vmem:[%s1 + $0x68] sm:$0xff]
    %v63 = vld [vmem:[%s1 + $0x70] sm:$0xff]
    %v64 = vld [vmem:[%s1 + $0x78] sm:$0xff]
    %v65 = vld [vmem:[%s2] sm:$0xff]
    %v66 = vld [vmem:[%s2 + $0x8] sm:$0xff]
    %v67 = vld [vmem:[%s2 + $0x10] sm:$0xff]
    %v68 = vld [vmem:[%s2 + $0x18] sm:$0xff]
    %v69 = vld [vmem:[%s2 + $0x20] sm:$0xff]
    %v70 = vld [vmem:[%s2 + $0x28] sm:$0xff]
    %v71 = vld [vmem:[%s2 + $0x30] sm:$0xff]
    %v72 = vld [vmem:[%s2 + $0x38] sm:$0xff]
    %v73 = vld [vmem:[%s2 + $0x40] sm:$0xff]
    %v74 = vld [vmem:[%s2 + $0x48] sm:$0xff]
    %v75 = vld [vmem:[%s2 + $0x50] sm:$0xff]
    %v76 = vld [vmem:[%s2 + $0x58] sm:$0xff]
    %v77 = vld [vmem:[%s2 + $0x60] sm:$0xff]
    %v78 = vld [vmem:[%s2 + $0x68] sm:$0xff]
    %v79 = vld [vmem:[%s2 + $0x70] sm:$0xff]
    %v80 = vld [vmem:[%s2 + $0x78] sm:$0xff]
    %v81 = vpack.c.bf16 %v50, %v49
    %v82 = vpack.c.bf16 %v52, %v51
    %v83 = vpack.c.bf16 %v54, %v53
    %v84 = vpack.c.bf16 %v56, %v55
    %v85 = vpack.c.bf16 %v58, %v57
    %v86 = vpack.c.bf16 %v60, %v59
    %v87 = vpack.c.bf16 %v62, %v61
    %v88 = vpack.c.bf16 %v64, %v63
    %v89 = vpack.c.bf16 %v66, %v65
    %v90 = vpack.c.bf16 %v68, %v67
    %v91 = vpack.c.bf16 %v70, %v69
    %v92 = vpack.c.bf16 %v72, %v71
    %v93 = vpack.c.bf16 %v74, %v73
    %v94 = vpack.c.bf16 %v76, %v75
    %v95 = vpack.c.bf16 %v78, %v77
    %v96 = vpack.c.bf16 %v80, %v79
    %v97 = vld [vmem:[%s3] sm:$0xf]
    %v98 = vld [vmem:[%s3 + $0x4] sm:$0xf]
    %v99 = vld [vmem:[%s4] sm:$0x1]
    %v101 = vperm.slane %v99, 0
    %v105 = vunpack.c.l.b16 %v97
    %v106 = vunpack.c.l.b16 %v98
    %v107 = vpack.c.b16 %v106, %v105
    %vm109 = vcmask 130048
    %v111 = vsel %vm109, %v81, 0
    %v114 = vsel %vm109, %v82, 0
    %v117 = vsel %vm109, %v83, 0
    %v120 = vsel %vm109, %v84, 0
    %v123 = vsel %vm109, %v85, 0
    %v126 = vsel %vm109, %v86, 0
    %v129 = vsel %vm109, %v87, 0
    %v132 = vsel %vm109, %v88, 0
    %v135 = vsel %vm109, %v89, 0
    %v138 = vsel %vm109, %v90, 0
    %v141 = vsel %vm109, %v91, 0
    %v144 = vsel %vm109, %v92, 0
    %v147 = vsel %vm109, %v93, 0
    %v150 = vsel %vm109, %v94, 0
    %v153 = vsel %vm109, %v95, 0
    %v156 = vsel %vm109, %v96, 0
    %158 = vmatpush.bf16.msra.mxu0 0
    %159 = vmatpush.bf16.msra.mxu0 0
    %160 = vmatpush.bf16.msra.mxu0 0
    %161 = vmatpush.bf16.msra.mxu0 0
    %162 = vmatpush.bf16.msra.mxu0 0
    %163 = vmatpush.bf16.msra.mxu0 0
    %164 = vmatpush.bf16.msra.mxu0 0
    %165 = vmatpush.bf16.msra.mxu0 %v107
    %166 = vmatmul.bf16.gmra.mxu0 %v111
    %v167 = vpop.f32.mrf.mxu0
    %v168 = vadd.f32 %v101, %v167
    %v169 = vpop.f32.mrf.mxu0
    %v170 = vadd.f32 %v101, %v169
    %171 = vmatmul.bf16.gmra.mxu0 %v114
    %v172 = vpop.f32.mrf.mxu0
    %v173 = vadd.f32 %v101, %v172
    %v174 = vpop.f32.mrf.mxu0
    %v175 = vadd.f32 %v101, %v174
    %176 = vmatmul.bf16.gmra.mxu0 %v117
    %v177 = vpop.f32.mrf.mxu0
    %v178 = vadd.f32 %v101, %v177
    %v179 = vpop.f32.mrf.mxu0
    %v180 = vadd.f32 %v101, %v179
    %181 = vmatmul.bf16.gmra.mxu0 %v120
    %v182 = vpop.f32.mrf.mxu0
    %v183 = vadd.f32 %v101, %v182
    %v184 = vpop.f32.mrf.mxu0
    %v185 = vadd.f32 %v101, %v184
    %186 = vmatmul.bf16.gmra.mxu0 %v123
    %v187 = vpop.f32.mrf.mxu0
    %v188 = vadd.f32 %v101, %v187
    %v189 = vpop.f32.mrf.mxu0
    %v190 = vadd.f32 %v101, %v189
    %191 = vmatmul.bf16.gmra.mxu0 %v126
    %v192 = vpop.f32.mrf.mxu0
    %v193 = vadd.f32 %v101, %v192
    %v194 = vpop.f32.mrf.mxu0
    %v195 = vadd.f32 %v101, %v194
    %196 = vmatmul.bf16.gmra.mxu0 %v129
    %v197 = vpop.f32.mrf.mxu0
    %v198 = vadd.f32 %v101, %v197
    %v199 = vpop.f32.mrf.mxu0
    %v200 = vadd.f32 %v101, %v199
    %201 = vmatmul.bf16.gmra.mxu0 %v132
    %v202 = vpop.f32.mrf.mxu0
    %v203 = vadd.f32 %v101, %v202
    %v204 = vpop.f32.mrf.mxu0
    %v205 = vadd.f32 %v101, %v204
    %206 = vmatmul.bf16.gmra.mxu0 %v135
    %v207 = vpop.f32.mrf.mxu0
    %v208 = vadd.f32 %v101, %v207
    %v209 = vpop.f32.mrf.mxu0
    %v210 = vadd.f32 %v101, %v209
    %211 = vmatmul.bf16.gmra.mxu0 %v138
    %v212 = vpop.f32.mrf.mxu0
    %v213 = vadd.f32 %v101, %v212
    %v214 = vpop.f32.mrf.mxu0
    %v215 = vadd.f32 %v101, %v214
    %216 = vmatmul.bf16.gmra.mxu0 %v141
    %v217 = vpop.f32.mrf.mxu0
    %v218 = vadd.f32 %v101, %v217
    %v219 = vpop.f32.mrf.mxu0
    %v220 = vadd.f32 %v101, %v219
    %221 = vmatmul.bf16.gmra.mxu0 %v144
    %v222 = vpop.f32.mrf.mxu0
    %v223 = vadd.f32 %v101, %v222
    %v224 = vpop.f32.mrf.mxu0
    %v225 = vadd.f32 %v101, %v224
    %226 = vmatmul.bf16.gmra.mxu0 %v147
    %v227 = vpop.f32.mrf.mxu0
    %v228 = vadd.f32 %v101, %v227
    %v229 = vpop.f32.mrf.mxu0
    %v230 = vadd.f32 %v101, %v229
    %231 = vmatmul.bf16.gmra.mxu0 %v150
    %v232 = vpop.f32.mrf.mxu0
    %v233 = vadd.f32 %v101, %v232
    %v234 = vpop.f32.mrf.mxu0
    %v235 = vadd.f32 %v101, %v234
    %236 = vmatmul.bf16.gmra.mxu0 %v153
    %v237 = vpop.f32.mrf.mxu0
    %v238 = vadd.f32 %v101, %v237
    %v239 = vpop.f32.mrf.mxu0
    %v240 = vadd.f32 %v101, %v239
    %241 = vmatmul.bf16.gmra.mxu0 %v156
    %v242 = vpop.f32.mrf.mxu0
    %v243 = vadd.f32 %v101, %v242
    %v244 = vpop.f32.mrf.mxu0
    %v245 = vadd.f32 %v101, %v244
    %246 = vdwg.mxu0
    %v247 = vmul.f32 %v168, 0.5
    %v248 = vmul.f32 %v170, 0.5
    %v249 = vmul.f32 %v173, 0.5
    %v250 = vmul.f32 %v175, 0.5
    %v251 = vmul.f32 %v178, 0.5
    %v252 = vmul.f32 %v180, 0.5
    %v253 = vmul.f32 %v183, 0.5
    %v254 = vmul.f32 %v185, 0.5
    %v255 = vmul.f32 %v188, 0.5
    %v256 = vmul.f32 %v190, 0.5
    %v257 = vmul.f32 %v193, 0.5
    %v258 = vmul.f32 %v195, 0.5
    %v259 = vmul.f32 %v198, 0.5
    %v260 = vmul.f32 %v200, 0.5
    %v261 = vmul.f32 %v203, 0.5
    %v262 = vmul.f32 %v205, 0.5
    %v263 = vmul.f32 %v208, 0.5
    %v264 = vmul.f32 %v210, 0.5
    %v265 = vmul.f32 %v213, 0.5
    %v266 = vmul.f32 %v215, 0.5
    %v267 = vmul.f32 %v218, 0.5
    %v268 = vmul.f32 %v220, 0.5
    %v269 = vmul.f32 %v223, 0.5
    %v270 = vmul.f32 %v225, 0.5
    %v271 = vmul.f32 %v228, 0.5
    %v272 = vmul.f32 %v230, 0.5
    %v273 = vmul.f32 %v233, 0.5
    %v274 = vmul.f32 %v235, 0.5
    %v275 = vmul.f32 %v238, 0.5
    %v276 = vmul.f32 %v240, 0.5
    %v277 = vmul.f32 %v243, 0.5
    %v278 = vmul.f32 %v245, 0.5
    %v279 = vtanh.pop %v247
    %v280 = vtanh.pop %v248
    %v281 = vtanh.pop %v249
    %v282 = vtanh.pop %v250
    %v283 = vtanh.pop %v251
    %v284 = vtanh.pop %v252
    %v285 = vtanh.pop %v253
    %v286 = vtanh.pop %v254
    %v287 = vtanh.pop %v255
    %v288 = vtanh.pop %v256
    %v289 = vtanh.pop %v257
    %v290 = vtanh.pop %v258
    %v291 = vtanh.pop %v259
    %v292 = vtanh.pop %v260
    %v293 = vtanh.pop %v261
    %v294 = vtanh.pop %v262
    %v295 = vtanh.pop %v263
    %v296 = vtanh.pop %v264
    %v297 = vtanh.pop %v265
    %v298 = vtanh.pop %v266
    %v299 = vtanh.pop %v267
    %v300 = vtanh.pop %v268
    %v301 = vtanh.pop %v269
    %v302 = vtanh.pop %v270
    %v303 = vtanh.pop %v271
    %v304 = vtanh.pop %v272
    %v305 = vtanh.pop %v273
    %v306 = vtanh.pop %v274
    %v307 = vtanh.pop %v275
    %v308 = vtanh.pop %v276
    %v309 = vtanh.pop %v277
    %v310 = vtanh.pop %v278
    %v311 = vmul.f32 %v279, 0.5
    %v312 = vmul.f32 %v280, 0.5
    %v313 = vmul.f32 %v281, 0.5
    %v314 = vmul.f32 %v282, 0.5
    %v315 = vmul.f32 %v283, 0.5
    %v316 = vmul.f32 %v284, 0.5
    %v317 = vmul.f32 %v285, 0.5
    %v318 = vmul.f32 %v286, 0.5
    %v319 = vmul.f32 %v287, 0.5
    %v320 = vmul.f32 %v288, 0.5
    %v321 = vmul.f32 %v289, 0.5
    %v322 = vmul.f32 %v290, 0.5
    %v323 = vmul.f32 %v291, 0.5
    %v324 = vmul.f32 %v292, 0.5
    %v325 = vmul.f32 %v293, 0.5
    %v326 = vmul.f32 %v294, 0.5
    %v327 = vmul.f32 %v295, 0.5
    %v328 = vmul.f32 %v296, 0.5
    %v329 = vmul.f32 %v297, 0.5
    %v330 = vmul.f32 %v298, 0.5
    %v331 = vmul.f32 %v299, 0.5
    %v332 = vmul.f32 %v300, 0.5
    %v333 = vmul.f32 %v301, 0.5
    %v334 = vmul.f32 %v302, 0.5
    %v335 = vmul.f32 %v303, 0.5
    %v336 = vmul.f32 %v304, 0.5
    %v337 = vmul.f32 %v305, 0.5
    %v338 = vmul.f32 %v306, 0.5
    %v339 = vmul.f32 %v307, 0.5
    %v340 = vmul.f32 %v308, 0.5
    %v341 = vmul.f32 %v309, 0.5
    %v342 = vmul.f32 %v310, 0.5
    %v343 = vadd.f32 %v311, 0.5
    %v344 = vadd.f32 %v312, 0.5
    %v345 = vadd.f32 %v313, 0.5
    %v346 = vadd.f32 %v314, 0.5
    %v347 = vadd.f32 %v315, 0.5
    %v348 = vadd.f32 %v316, 0.5
    %v349 = vadd.f32 %v317, 0.5
    %v350 = vadd.f32 %v318, 0.5
    %v351 = vadd.f32 %v319, 0.5
    %v352 = vadd.f32 %v320, 0.5
    %v353 = vadd.f32 %v321, 0.5
    %v354 = vadd.f32 %v322, 0.5
    %v355 = vadd.f32 %v323, 0.5
    %v356 = vadd.f32 %v324, 0.5
    %v357 = vadd.f32 %v325, 0.5
    %v358 = vadd.f32 %v326, 0.5
    %v359 = vadd.f32 %v327, 0.5
    %v360 = vadd.f32 %v328, 0.5
    %v361 = vadd.f32 %v329, 0.5
    %v362 = vadd.f32 %v330, 0.5
    %v363 = vadd.f32 %v331, 0.5
    %v364 = vadd.f32 %v332, 0.5
    %v365 = vadd.f32 %v333, 0.5
    %v366 = vadd.f32 %v334, 0.5
    %v367 = vadd.f32 %v335, 0.5
    %v368 = vadd.f32 %v336, 0.5
    %v369 = vadd.f32 %v337, 0.5
    %v370 = vadd.f32 %v338, 0.5
    %v371 = vadd.f32 %v339, 0.5
    %v372 = vadd.f32 %v340, 0.5
    %v373 = vadd.f32 %v341, 0.5
    %v374 = vadd.f32 %v342, 0.5
    %v375 = vmul.f32 %v168, %v343
    %v376 = vmul.f32 %v170, %v344
    %v377 = vmul.f32 %v173, %v345
    %v378 = vmul.f32 %v175, %v346
    %v379 = vmul.f32 %v178, %v347
    %v380 = vmul.f32 %v180, %v348
    %v381 = vmul.f32 %v183, %v349
    %v382 = vmul.f32 %v185, %v350
    %v383 = vmul.f32 %v188, %v351
    %v384 = vmul.f32 %v190, %v352
    %v385 = vmul.f32 %v193, %v353
    %v386 = vmul.f32 %v195, %v354
    %v387 = vmul.f32 %v198, %v355
    %v388 = vmul.f32 %v200, %v356
    %v389 = vmul.f32 %v203, %v357
    %v390 = vmul.f32 %v205, %v358
    %v391 = vmul.f32 %v208, %v359
    %v392 = vmul.f32 %v210, %v360
    %v393 = vmul.f32 %v213, %v361
    %v394 = vmul.f32 %v215, %v362
    %v395 = vmul.f32 %v218, %v363
    %v396 = vmul.f32 %v220, %v364
    %v397 = vmul.f32 %v223, %v365
    %v398 = vmul.f32 %v225, %v366
    %v399 = vmul.f32 %v228, %v367
    %v400 = vmul.f32 %v230, %v368
    %v401 = vmul.f32 %v233, %v369
    %v402 = vmul.f32 %v235, %v370
    %v403 = vmul.f32 %v238, %v371
    %v404 = vmul.f32 %v240, %v372
    %v405 = vmul.f32 %v243, %v373
    %v406 = vmul.f32 %v245, %v374
    %v407 = vpack.c.bf16 %v376, %v375
    %v408 = vpack.c.bf16 %v378, %v377
    %v409 = vpack.c.bf16 %v380, %v379
    %v410 = vpack.c.bf16 %v382, %v381
    %v411 = vpack.c.bf16 %v384, %v383
    %v412 = vpack.c.bf16 %v386, %v385
    %v413 = vpack.c.bf16 %v388, %v387
    %v414 = vpack.c.bf16 %v390, %v389
    %v415 = vpack.c.bf16 %v392, %v391
    %v416 = vpack.c.bf16 %v394, %v393
    %v417 = vpack.c.bf16 %v396, %v395
    %v418 = vpack.c.bf16 %v398, %v397
    %v419 = vpack.c.bf16 %v400, %v399
    %v420 = vpack.c.bf16 %v402, %v401
    %v421 = vpack.c.bf16 %v404, %v403
    %v422 = vpack.c.bf16 %v406, %v405
    %v423 = vld [vmem:[%s5] sm:$0xf]
    %v424 = vld [vmem:[%s5 + $0x4] sm:$0xf]
    %v425 = vld [vmem:[%s5 + $0x8] sm:$0xf]
    %v426 = vld [vmem:[%s5 + $0xc] sm:$0xf]
    %v427 = vld [vmem:[%s6] sm:$0x1]
    %v429 = vperm.slane %v427, 0
    %v435 = vunpack.c.l.b16 %v423
    %v436 = vunpack.c.l.b16 %v424
    %v437 = vunpack.c.l.b16 %v425
    %v438 = vunpack.c.l.b16 %v426
    %v439 = vpack.c.b16 %v436, %v435
    %v440 = vpack.c.b16 %v438, %v437
    %vm443 = vcmask 261120
    %v445 = vsel %vm443, %v407, 0
    %v448 = vsel %vm443, %v408, 0
    %v451 = vsel %vm443, %v409, 0
    %v454 = vsel %vm443, %v410, 0
    %v457 = vsel %vm443, %v411, 0
    %v460 = vsel %vm443, %v412, 0
    %v463 = vsel %vm443, %v413, 0
    %v466 = vsel %vm443, %v414, 0
    %v469 = vsel %vm443, %v415, 0
    %v472 = vsel %vm443, %v416, 0
    %v475 = vsel %vm443, %v417, 0
    %v478 = vsel %vm443, %v418, 0
    %v481 = vsel %vm443, %v419, 0
    %v484 = vsel %vm443, %v420, 0
    %v487 = vsel %vm443, %v421, 0
    %v490 = vsel %vm443, %v422, 0
    %492 = vmatpush.bf16.msra.mxu0 0
    %493 = vmatpush.bf16.msra.mxu0 0
    %494 = vmatpush.bf16.msra.mxu0 0
    %495 = vmatpush.bf16.msra.mxu0 0
    %496 = vmatpush.bf16.msra.mxu0 0
    %497 = vmatpush.bf16.msra.mxu0 0
    %498 = vmatpush.bf16.msra.mxu0 %v440
    %499 = vmatpush.bf16.msra.mxu0 %v439
    %500 = vmatmul.bf16.gmra.mxu0 %v445
    %v501 = vpop.f32.mrf.mxu0
    %v502 = vadd.f32 %v429, %v501
    %v503 = vpop.f32.mrf.mxu0
    %v504 = vadd.f32 %v429, %v503
    %505 = vmatmul.bf16.gmra.mxu0 %v448
    %v506 = vpop.f32.mrf.mxu0
    %v507 = vadd.f32 %v429, %v506
    %v508 = vpop.f32.mrf.mxu0
    %v509 = vadd.f32 %v429, %v508
    %510 = vmatmul.bf16.gmra.mxu0 %v451
    %v511 = vpop.f32.mrf.mxu0
    %v512 = vadd.f32 %v429, %v511
    %v513 = vpop.f32.mrf.mxu0
    %v514 = vadd.f32 %v429, %v513
    %515 = vmatmul.bf16.gmra.mxu0 %v454
    %v516 = vpop.f32.mrf.mxu0
    %v517 = vadd.f32 %v429, %v516
    %v518 = vpop.f32.mrf.mxu0
    %v519 = vadd.f32 %v429, %v518
    %520 = vmatmul.bf16.gmra.mxu0 %v457
    %v521 = vpop.f32.mrf.mxu0
    %v522 = vadd.f32 %v429, %v521
    %v523 = vpop.f32.mrf.mxu0
    %v524 = vadd.f32 %v429, %v523
    %525 = vmatmul.bf16.gmra.mxu0 %v460
    %v526 = vpop.f32.mrf.mxu0
    %v527 = vadd.f32 %v429, %v526
    %v528 = vpop.f32.mrf.mxu0
    %v529 = vadd.f32 %v429, %v528
    %530 = vmatmul.bf16.gmra.mxu0 %v463
    %v531 = vpop.f32.mrf.mxu0
    %v532 = vadd.f32 %v429, %v531
    %v533 = vpop.f32.mrf.mxu0
    %v534 = vadd.f32 %v429, %v533
    %535 = vmatmul.bf16.gmra.mxu0 %v466
    %v536 = vpop.f32.mrf.mxu0
    %v537 = vadd.f32 %v429, %v536
    %v538 = vpop.f32.mrf.mxu0
    %v539 = vadd.f32 %v429, %v538
    %540 = vmatmul.bf16.gmra.mxu0 %v469
    %v541 = vpop.f32.mrf.mxu0
    %v542 = vadd.f32 %v429, %v541
    %v543 = vpop.f32.mrf.mxu0
    %v544 = vadd.f32 %v429, %v543
    %545 = vmatmul.bf16.gmra.mxu0 %v472
    %v546 = vpop.f32.mrf.mxu0
    %v547 = vadd.f32 %v429, %v546
    %v548 = vpop.f32.mrf.mxu0
    %v549 = vadd.f32 %v429, %v548
    %550 = vmatmul.bf16.gmra.mxu0 %v475
    %v551 = vpop.f32.mrf.mxu0
    %v552 = vadd.f32 %v429, %v551
    %v553 = vpop.f32.mrf.mxu0
    %v554 = vadd.f32 %v429, %v553
    %555 = vmatmul.bf16.gmra.mxu0 %v478
    %v556 = vpop.f32.mrf.mxu0
    %v557 = vadd.f32 %v429, %v556
    %v558 = vpop.f32.mrf.mxu0
    %v559 = vadd.f32 %v429, %v558
    %560 = vmatmul.bf16.gmra.mxu0 %v481
    %v561 = vpop.f32.mrf.mxu0
    %v562 = vadd.f32 %v429, %v561
    %v563 = vpop.f32.mrf.mxu0
    %v564 = vadd.f32 %v429, %v563
    %565 = vmatmul.bf16.gmra.mxu0 %v484
    %v566 = vpop.f32.mrf.mxu0
    %v567 = vadd.f32 %v429, %v566
    %v568 = vpop.f32.mrf.mxu0
    %v569 = vadd.f32 %v429, %v568
    %570 = vmatmul.bf16.gmra.mxu0 %v487
    %v571 = vpop.f32.mrf.mxu0
    %v572 = vadd.f32 %v429, %v571
    %v573 = vpop.f32.mrf.mxu0
    %v574 = vadd.f32 %v429, %v573
    %575 = vmatmul.bf16.gmra.mxu0 %v490
    %v576 = vpop.f32.mrf.mxu0
    %v577 = vadd.f32 %v429, %v576
    %v578 = vpop.f32.mrf.mxu0
    %v579 = vadd.f32 %v429, %v578
    %580 = vdwg.mxu0
    %v581 = vmul.f32 %v502, 0.5
    %v582 = vmul.f32 %v504, 0.5
    %v583 = vmul.f32 %v507, 0.5
    %v584 = vmul.f32 %v509, 0.5
    %v585 = vmul.f32 %v512, 0.5
    %v586 = vmul.f32 %v514, 0.5
    %v587 = vmul.f32 %v517, 0.5
    %v588 = vmul.f32 %v519, 0.5
    %v589 = vmul.f32 %v522, 0.5
    %v590 = vmul.f32 %v524, 0.5
    %v591 = vmul.f32 %v527, 0.5
    %v592 = vmul.f32 %v529, 0.5
    %v593 = vmul.f32 %v532, 0.5
    %v594 = vmul.f32 %v534, 0.5
    %v595 = vmul.f32 %v537, 0.5
    %v596 = vmul.f32 %v539, 0.5
    %v597 = vmul.f32 %v542, 0.5
    %v598 = vmul.f32 %v544, 0.5
    %v599 = vmul.f32 %v547, 0.5
    %v600 = vmul.f32 %v549, 0.5
    %v601 = vmul.f32 %v552, 0.5
    %v602 = vmul.f32 %v554, 0.5
    %v603 = vmul.f32 %v557, 0.5
    %v604 = vmul.f32 %v559, 0.5
    %v605 = vmul.f32 %v562, 0.5
    %v606 = vmul.f32 %v564, 0.5
    %v607 = vmul.f32 %v567, 0.5
    %v608 = vmul.f32 %v569, 0.5
    %v609 = vmul.f32 %v572, 0.5
    %v610 = vmul.f32 %v574, 0.5
    %v611 = vmul.f32 %v577, 0.5
    %v612 = vmul.f32 %v579, 0.5
    %v613 = vtanh.pop %v581
    %v614 = vtanh.pop %v582
    %v615 = vtanh.pop %v583
    %v616 = vtanh.pop %v584
    %v617 = vtanh.pop %v585
    %v618 = vtanh.pop %v586
    %v619 = vtanh.pop %v587
    %v620 = vtanh.pop %v588
    %v621 = vtanh.pop %v589
    %v622 = vtanh.pop %v590
    %v623 = vtanh.pop %v591
    %v624 = vtanh.pop %v592
    %v625 = vtanh.pop %v593
    %v626 = vtanh.pop %v594
    %v627 = vtanh.pop %v595
    %v628 = vtanh.pop %v596
    %v629 = vtanh.pop %v597
    %v630 = vtanh.pop %v598
    %v631 = vtanh.pop %v599
    %v632 = vtanh.pop %v600
    %v633 = vtanh.pop %v601
    %v634 = vtanh.pop %v602
    %v635 = vtanh.pop %v603
    %v636 = vtanh.pop %v604
    %v637 = vtanh.pop %v605
    %v638 = vtanh.pop %v606
    %v639 = vtanh.pop %v607
    %v640 = vtanh.pop %v608
    %v641 = vtanh.pop %v609
    %v642 = vtanh.pop %v610
    %v643 = vtanh.pop %v611
    %v644 = vtanh.pop %v612
    %v645 = vmul.f32 %v613, 0.5
    %v646 = vmul.f32 %v614, 0.5
    %v647 = vmul.f32 %v615, 0.5
    %v648 = vmul.f32 %v616, 0.5
    %v649 = vmul.f32 %v617, 0.5
    %v650 = vmul.f32 %v618, 0.5
    %v651 = vmul.f32 %v619, 0.5
    %v652 = vmul.f32 %v620, 0.5
    %v653 = vmul.f32 %v621, 0.5
    %v654 = vmul.f32 %v622, 0.5
    %v655 = vmul.f32 %v623, 0.5
    %v656 = vmul.f32 %v624, 0.5
    %v657 = vmul.f32 %v625, 0.5
    %v658 = vmul.f32 %v626, 0.5
    %v659 = vmul.f32 %v627, 0.5
    %v660 = vmul.f32 %v628, 0.5
    %v661 = vmul.f32 %v629, 0.5
    %v662 = vmul.f32 %v630, 0.5
    %v663 = vmul.f32 %v631, 0.5
    %v664 = vmul.f32 %v632, 0.5
    %v665 = vmul.f32 %v633, 0.5
    %v666 = vmul.f32 %v634, 0.5
    %v667 = vmul.f32 %v635, 0.5
    %v668 = vmul.f32 %v636, 0.5
    %v669 = vmul.f32 %v637, 0.5
    %v670 = vmul.f32 %v638, 0.5
    %v671 = vmul.f32 %v639, 0.5
    %v672 = vmul.f32 %v640, 0.5
    %v673 = vmul.f32 %v641, 0.5
    %v674 = vmul.f32 %v642, 0.5
    %v675 = vmul.f32 %v643, 0.5
    %v676 = vmul.f32 %v644, 0.5
    %v677 = vadd.f32 %v645, 0.5
    %v678 = vadd.f32 %v646, 0.5
    %v679 = vadd.f32 %v647, 0.5
    %v680 = vadd.f32 %v648, 0.5
    %v681 = vadd.f32 %v649, 0.5
    %v682 = vadd.f32 %v650, 0.5
    %v683 = vadd.f32 %v651, 0.5
    %v684 = vadd.f32 %v652, 0.5
    %v685 = vadd.f32 %v653, 0.5
    %v686 = vadd.f32 %v654, 0.5
    %v687 = vadd.f32 %v655, 0.5
    %v688 = vadd.f32 %v656, 0.5
    %v689 = vadd.f32 %v657, 0.5
    %v690 = vadd.f32 %v658, 0.5
    %v691 = vadd.f32 %v659, 0.5
    %v692 = vadd.f32 %v660, 0.5
    %v693 = vadd.f32 %v661, 0.5
    %v694 = vadd.f32 %v662, 0.5
    %v695 = vadd.f32 %v663, 0.5
    %v696 = vadd.f32 %v664, 0.5
    %v697 = vadd.f32 %v665, 0.5
    %v698 = vadd.f32 %v666, 0.5
    %v699 = vadd.f32 %v667, 0.5
    %v700 = vadd.f32 %v668, 0.5
    %v701 = vadd.f32 %v669, 0.5
    %v702 = vadd.f32 %v670, 0.5
    %v703 = vadd.f32 %v671, 0.5
    %v704 = vadd.f32 %v672, 0.5
    %v705 = vadd.f32 %v673, 0.5
    %v706 = vadd.f32 %v674, 0.5
    %v707 = vadd.f32 %v675, 0.5
    %v708 = vadd.f32 %v676, 0.5
    %v709 = vmul.f32 %v502, %v677
    %v710 = vmul.f32 %v504, %v678
    %v711 = vmul.f32 %v507, %v679
    %v712 = vmul.f32 %v509, %v680
    %v713 = vmul.f32 %v512, %v681
    %v714 = vmul.f32 %v514, %v682
    %v715 = vmul.f32 %v517, %v683
    %v716 = vmul.f32 %v519, %v684
    %v717 = vmul.f32 %v522, %v685
    %v718 = vmul.f32 %v524, %v686
    %v719 = vmul.f32 %v527, %v687
    %v720 = vmul.f32 %v529, %v688
    %v721 = vmul.f32 %v532, %v689
    %v722 = vmul.f32 %v534, %v690
    %v723 = vmul.f32 %v537, %v691
    %v724 = vmul.f32 %v539, %v692
    %v725 = vmul.f32 %v542, %v693
    %v726 = vmul.f32 %v544, %v694
    %v727 = vmul.f32 %v547, %v695
    %v728 = vmul.f32 %v549, %v696
    %v729 = vmul.f32 %v552, %v697
    %v730 = vmul.f32 %v554, %v698
    %v731 = vmul.f32 %v557, %v699
    %v732 = vmul.f32 %v559, %v700
    %v733 = vmul.f32 %v562, %v701
    %v734 = vmul.f32 %v564, %v702
    %v735 = vmul.f32 %v567, %v703
    %v736 = vmul.f32 %v569, %v704
    %v737 = vmul.f32 %v572, %v705
    %v738 = vmul.f32 %v574, %v706
    %v739 = vmul.f32 %v577, %v707
    %v740 = vmul.f32 %v579, %v708
    %v741 = vpack.c.bf16 %v710, %v709
    %v742 = vpack.c.bf16 %v712, %v711
    %v743 = vpack.c.bf16 %v714, %v713
    %v744 = vpack.c.bf16 %v716, %v715
    %v745 = vpack.c.bf16 %v718, %v717
    %v746 = vpack.c.bf16 %v720, %v719
    %v747 = vpack.c.bf16 %v722, %v721
    %v748 = vpack.c.bf16 %v724, %v723
    %v749 = vpack.c.bf16 %v726, %v725
    %v750 = vpack.c.bf16 %v728, %v727
    %v751 = vpack.c.bf16 %v730, %v729
    %v752 = vpack.c.bf16 %v732, %v731
    %v753 = vpack.c.bf16 %v734, %v733
    %v754 = vpack.c.bf16 %v736, %v735
    %v755 = vpack.c.bf16 %v738, %v737
    %v756 = vpack.c.bf16 %v740, %v739
    %v757 = vld [vmem:[%s7] sm:$0xf]
    %v758 = vld [vmem:[%s7 + $0x4] sm:$0xf]
    %v759 = vld [vmem:[%s7 + $0x8] sm:$0xf]
    %v760 = vld [vmem:[%s7 + $0xc] sm:$0xf]
    %v761 = vld [vmem:[%s8] sm:$0x1]
    %v763 = vperm.slane %v761, 0
    %v769 = vunpack.c.l.b16 %v757
    %v770 = vunpack.c.l.b16 %v758
    %v771 = vunpack.c.l.b16 %v759
    %v772 = vunpack.c.l.b16 %v760
    %v773 = vpack.c.b16 %v770, %v769
    %v774 = vpack.c.b16 %v772, %v771
    %v778 = vsel %vm443, %v741, 0
    %v781 = vsel %vm443, %v742, 0
    %v784 = vsel %vm443, %v743, 0
    %v787 = vsel %vm443, %v744, 0
    %v790 = vsel %vm443, %v745, 0
    %v793 = vsel %vm443, %v746, 0
    %v796 = vsel %vm443, %v747, 0
    %v799 = vsel %vm443, %v748, 0
    %v802 = vsel %vm443, %v749, 0
    %v805 = vsel %vm443, %v750, 0
    %v808 = vsel %vm443, %v751, 0
    %v811 = vsel %vm443, %v752, 0
    %v814 = vsel %vm443, %v753, 0
    %v817 = vsel %vm443, %v754, 0
    %v820 = vsel %vm443, %v755, 0
    %v823 = vsel %vm443, %v756, 0
    %825 = vmatpush.bf16.msra.mxu0 0
    %826 = vmatpush.bf16.msra.mxu0 0
    %827 = vmatpush.bf16.msra.mxu0 0
    %828 = vmatpush.bf16.msra.mxu0 0
    %829 = vmatpush.bf16.msra.mxu0 0
    %830 = vmatpush.bf16.msra.mxu0 0
    %831 = vmatpush.bf16.msra.mxu0 %v774
    %832 = vmatpush.bf16.msra.mxu0 %v773
    %833 = vmatmul.bf16.gmra.mxu0 %v778
    %v834 = vpop.f32.mrf.mxu0
    %v835 = vadd.f32 %v763, %v834
    %v836 = vpop.f32.mrf.mxu0
    %v837 = vadd.f32 %v763, %v836
    %838 = vmatmul.bf16.gmra.mxu0 %v781
    %v839 = vpop.f32.mrf.mxu0
    %v840 = vadd.f32 %v763, %v839
    %v841 = vpop.f32.mrf.mxu0
    %v842 = vadd.f32 %v763, %v841
    %843 = vmatmul.bf16.gmra.mxu0 %v784
    %v844 = vpop.f32.mrf.mxu0
    %v845 = vadd.f32 %v763, %v844
    %v846 = vpop.f32.mrf.mxu0
    %v847 = vadd.f32 %v763, %v846
    %848 = vmatmul.bf16.gmra.mxu0 %v787
    %v849 = vpop.f32.mrf.mxu0
    %v850 = vadd.f32 %v763, %v849
    %v851 = vpop.f32.mrf.mxu0
    %v852 = vadd.f32 %v763, %v851
    %853 = vmatmul.bf16.gmra.mxu0 %v790
    %v854 = vpop.f32.mrf.mxu0
    %v855 = vadd.f32 %v763, %v854
    %v856 = vpop.f32.mrf.mxu0
    %v857 = vadd.f32 %v763, %v856
    %858 = vmatmul.bf16.gmra.mxu0 %v793
    %v859 = vpop.f32.mrf.mxu0
    %v860 = vadd.f32 %v763, %v859
    %v861 = vpop.f32.mrf.mxu0
    %v862 = vadd.f32 %v763, %v861
    %863 = vmatmul.bf16.gmra.mxu0 %v796
    %v864 = vpop.f32.mrf.mxu0
    %v865 = vadd.f32 %v763, %v864
    %v866 = vpop.f32.mrf.mxu0
    %v867 = vadd.f32 %v763, %v866
    %868 = vmatmul.bf16.gmra.mxu0 %v799
    %v869 = vpop.f32.mrf.mxu0
    %v870 = vadd.f32 %v763, %v869
    %v871 = vpop.f32.mrf.mxu0
    %v872 = vadd.f32 %v763, %v871
    %873 = vmatmul.bf16.gmra.mxu0 %v802
    %v874 = vpop.f32.mrf.mxu0
    %v875 = vadd.f32 %v763, %v874
    %v876 = vpop.f32.mrf.mxu0
    %v877 = vadd.f32 %v763, %v876
    %878 = vmatmul.bf16.gmra.mxu0 %v805
    %v879 = vpop.f32.mrf.mxu0
    %v880 = vadd.f32 %v763, %v879
    %v881 = vpop.f32.mrf.mxu0
    %v882 = vadd.f32 %v763, %v881
    %883 = vmatmul.bf16.gmra.mxu0 %v808
    %v884 = vpop.f32.mrf.mxu0
    %v885 = vadd.f32 %v763, %v884
    %v886 = vpop.f32.mrf.mxu0
    %v887 = vadd.f32 %v763, %v886
    %888 = vmatmul.bf16.gmra.mxu0 %v811
    %v889 = vpop.f32.mrf.mxu0
    %v890 = vadd.f32 %v763, %v889
    %v891 = vpop.f32.mrf.mxu0
    %v892 = vadd.f32 %v763, %v891
    %893 = vmatmul.bf16.gmra.mxu0 %v814
    %v894 = vpop.f32.mrf.mxu0
    %v895 = vadd.f32 %v763, %v894
    %v896 = vpop.f32.mrf.mxu0
    %v897 = vadd.f32 %v763, %v896
    %898 = vmatmul.bf16.gmra.mxu0 %v817
    %v899 = vpop.f32.mrf.mxu0
    %v900 = vadd.f32 %v763, %v899
    %v901 = vpop.f32.mrf.mxu0
    %v902 = vadd.f32 %v763, %v901
    %903 = vmatmul.bf16.gmra.mxu0 %v820
    %v904 = vpop.f32.mrf.mxu0
    %v905 = vadd.f32 %v763, %v904
    %v906 = vpop.f32.mrf.mxu0
    %v907 = vadd.f32 %v763, %v906
    %908 = vmatmul.bf16.gmra.mxu0 %v823
    %v909 = vpop.f32.mrf.mxu0
    %v910 = vadd.f32 %v763, %v909
    %v911 = vpop.f32.mrf.mxu0
    %v912 = vadd.f32 %v763, %v911
    %913 = vdwg.mxu0
    %v914 = vmul.f32 %v835, 0.5
    %v915 = vmul.f32 %v837, 0.5
    %v916 = vmul.f32 %v840, 0.5
    %v917 = vmul.f32 %v842, 0.5
    %v918 = vmul.f32 %v845, 0.5
    %v919 = vmul.f32 %v847, 0.5
    %v920 = vmul.f32 %v850, 0.5
    %v921 = vmul.f32 %v852, 0.5
    %v922 = vmul.f32 %v855, 0.5
    %v923 = vmul.f32 %v857, 0.5
    %v924 = vmul.f32 %v860, 0.5
    %v925 = vmul.f32 %v862, 0.5
    %v926 = vmul.f32 %v865, 0.5
    %v927 = vmul.f32 %v867, 0.5
    %v928 = vmul.f32 %v870, 0.5
    %v929 = vmul.f32 %v872, 0.5
    %v930 = vmul.f32 %v875, 0.5
    %v931 = vmul.f32 %v877, 0.5
    %v932 = vmul.f32 %v880, 0.5
    %v933 = vmul.f32 %v882, 0.5
    %v934 = vmul.f32 %v885, 0.5
    %v935 = vmul.f32 %v887, 0.5
    %v936 = vmul.f32 %v890, 0.5
    %v937 = vmul.f32 %v892, 0.5
    %v938 = vmul.f32 %v895, 0.5
    %v939 = vmul.f32 %v897, 0.5
    %v940 = vmul.f32 %v900, 0.5
    %v941 = vmul.f32 %v902, 0.5
    %v942 = vmul.f32 %v905, 0.5
    %v943 = vmul.f32 %v907, 0.5
    %v944 = vmul.f32 %v910, 0.5
    %v945 = vmul.f32 %v912, 0.5
    %v946 = vtanh.pop %v914
    %v947 = vtanh.pop %v915
    %v948 = vtanh.pop %v916
    %v949 = vtanh.pop %v917
    %v950 = vtanh.pop %v918
    %v951 = vtanh.pop %v919
    %v952 = vtanh.pop %v920
    %v953 = vtanh.pop %v921
    %v954 = vtanh.pop %v922
    %v955 = vtanh.pop %v923
    %v956 = vtanh.pop %v924
    %v957 = vtanh.pop %v925
    %v958 = vtanh.pop %v926
    %v959 = vtanh.pop %v927
    %v960 = vtanh.pop %v928
    %v961 = vtanh.pop %v929
    %v962 = vtanh.pop %v930
    %v963 = vtanh.pop %v931
    %v964 = vtanh.pop %v932
    %v965 = vtanh.pop %v933
    %v966 = vtanh.pop %v934
    %v967 = vtanh.pop %v935
    %v968 = vtanh.pop %v936
    %v969 = vtanh.pop %v937
    %v970 = vtanh.pop %v938
    %v971 = vtanh.pop %v939
    %v972 = vtanh.pop %v940
    %v973 = vtanh.pop %v941
    %v974 = vtanh.pop %v942
    %v975 = vtanh.pop %v943
    %v976 = vtanh.pop %v944
    %v977 = vtanh.pop %v945
    %v978 = vmul.f32 %v946, 0.5
    %v979 = vmul.f32 %v947, 0.5
    %v980 = vmul.f32 %v948, 0.5
    %v981 = vmul.f32 %v949, 0.5
    %v982 = vmul.f32 %v950, 0.5
    %v983 = vmul.f32 %v951, 0.5
    %v984 = vmul.f32 %v952, 0.5
    %v985 = vmul.f32 %v953, 0.5
    %v986 = vmul.f32 %v954, 0.5
    %v987 = vmul.f32 %v955, 0.5
    %v988 = vmul.f32 %v956, 0.5
    %v989 = vmul.f32 %v957, 0.5
    %v990 = vmul.f32 %v958, 0.5
    %v991 = vmul.f32 %v959, 0.5
    %v992 = vmul.f32 %v960, 0.5
    %v993 = vmul.f32 %v961, 0.5
    %v994 = vmul.f32 %v962, 0.5
    %v995 = vmul.f32 %v963, 0.5
    %v996 = vmul.f32 %v964, 0.5
    %v997 = vmul.f32 %v965, 0.5
    %v998 = vmul.f32 %v966, 0.5
    %v999 = vmul.f32 %v967, 0.5
    %v1000 = vmul.f32 %v968, 0.5
    %v1001 = vmul.f32 %v969, 0.5
    %v1002 = vmul.f32 %v970, 0.5
    %v1003 = vmul.f32 %v971, 0.5
    %v1004 = vmul.f32 %v972, 0.5
    %v1005 = vmul.f32 %v973, 0.5
    %v1006 = vmul.f32 %v974, 0.5
    %v1007 = vmul.f32 %v975, 0.5
    %v1008 = vmul.f32 %v976, 0.5
    %v1009 = vmul.f32 %v977, 0.5
    %v1010 = vadd.f32 %v978, 0.5
    %v1011 = vadd.f32 %v979, 0.5
    %v1012 = vadd.f32 %v980, 0.5
    %v1013 = vadd.f32 %v981, 0.5
    %v1014 = vadd.f32 %v982, 0.5
    %v1015 = vadd.f32 %v983, 0.5
    %v1016 = vadd.f32 %v984, 0.5
    %v1017 = vadd.f32 %v985, 0.5
    %v1018 = vadd.f32 %v986, 0.5
    %v1019 = vadd.f32 %v987, 0.5
    %v1020 = vadd.f32 %v988, 0.5
    %v1021 = vadd.f32 %v989, 0.5
    %v1022 = vadd.f32 %v990, 0.5
    %v1023 = vadd.f32 %v991, 0.5
    %v1024 = vadd.f32 %v992, 0.5
    %v1025 = vadd.f32 %v993, 0.5
    %v1026 = vadd.f32 %v994, 0.5
    %v1027 = vadd.f32 %v995, 0.5
    %v1028 = vadd.f32 %v996, 0.5
    %v1029 = vadd.f32 %v997, 0.5
    %v1030 = vadd.f32 %v998, 0.5
    %v1031 = vadd.f32 %v999, 0.5
    %v1032 = vadd.f32 %v1000, 0.5
    %v1033 = vadd.f32 %v1001, 0.5
    %v1034 = vadd.f32 %v1002, 0.5
    %v1035 = vadd.f32 %v1003, 0.5
    %v1036 = vadd.f32 %v1004, 0.5
    %v1037 = vadd.f32 %v1005, 0.5
    %v1038 = vadd.f32 %v1006, 0.5
    %v1039 = vadd.f32 %v1007, 0.5
    %v1040 = vadd.f32 %v1008, 0.5
    %v1041 = vadd.f32 %v1009, 0.5
    %v1042 = vmul.f32 %v835, %v1010
    %v1043 = vmul.f32 %v837, %v1011
    %v1044 = vmul.f32 %v840, %v1012
    %v1045 = vmul.f32 %v842, %v1013
    %v1046 = vmul.f32 %v845, %v1014
    %v1047 = vmul.f32 %v847, %v1015
    %v1048 = vmul.f32 %v850, %v1016
    %v1049 = vmul.f32 %v852, %v1017
    %v1050 = vmul.f32 %v855, %v1018
    %v1051 = vmul.f32 %v857, %v1019
    %v1052 = vmul.f32 %v860, %v1020
    %v1053 = vmul.f32 %v862, %v1021
    %v1054 = vmul.f32 %v865, %v1022
    %v1055 = vmul.f32 %v867, %v1023
    %v1056 = vmul.f32 %v870, %v1024
    %v1057 = vmul.f32 %v872, %v1025
    %v1058 = vmul.f32 %v875, %v1026
    %v1059 = vmul.f32 %v877, %v1027
    %v1060 = vmul.f32 %v880, %v1028
    %v1061 = vmul.f32 %v882, %v1029
    %v1062 = vmul.f32 %v885, %v1030
    %v1063 = vmul.f32 %v887, %v1031
    %v1064 = vmul.f32 %v890, %v1032
    %v1065 = vmul.f32 %v892, %v1033
    %v1066 = vmul.f32 %v895, %v1034
    %v1067 = vmul.f32 %v897, %v1035
    %v1068 = vmul.f32 %v900, %v1036
    %v1069 = vmul.f32 %v902, %v1037
    %v1070 = vmul.f32 %v905, %v1038
    %v1071 = vmul.f32 %v907, %v1039
    %v1072 = vmul.f32 %v910, %v1040
    %v1073 = vmul.f32 %v912, %v1041
    %v1074 = vld [vmem:[%s0] sm:$0xff]
    %v1075 = vld [vmem:[%s0 + $0x8] sm:$0xff]
    %v1076 = vld [vmem:[%s0 + $0x10] sm:$0xff]
    %v1077 = vld [vmem:[%s0 + $0x18] sm:$0xff]
    %v1078 = vld [vmem:[%s0 + $0x20] sm:$0xff]
    %v1079 = vld [vmem:[%s0 + $0x28] sm:$0xff]
    %v1080 = vld [vmem:[%s0 + $0x30] sm:$0xff]
    %v1081 = vld [vmem:[%s0 + $0x38] sm:$0xff]
    %v1082 = vld [vmem:[%s0 + $0x40] sm:$0xff]
    %v1083 = vld [vmem:[%s0 + $0x48] sm:$0xff]
    %v1084 = vld [vmem:[%s0 + $0x50] sm:$0xff]
    %v1085 = vld [vmem:[%s0 + $0x58] sm:$0xff]
    %v1086 = vld [vmem:[%s0 + $0x60] sm:$0xff]
    %v1087 = vld [vmem:[%s0 + $0x68] sm:$0xff]
    %v1088 = vld [vmem:[%s0 + $0x70] sm:$0xff]
    %v1089 = vld [vmem:[%s0 + $0x78] sm:$0xff]
    %v1090 = vld [vmem:[%s9] sm:$0x1]
    %1092 = vset.pattern.permute.xlu0 0
    %1093 = vperm.xlu0 %1092, %v1074
    %v1094 = vpop.permute.xlu0 %1093
    %1097 = vset.pattern.permute.xlu0 0
    %1098 = vperm.xlu0 %1097, %v1075
    %v1099 = vpop.permute.xlu0 %1098
    %1102 = vset.pattern.permute.xlu0 0
    %1103 = vperm.xlu0 %1102, %v1076
    %v1104 = vpop.permute.xlu0 %1103
    %1107 = vset.pattern.permute.xlu0 0
    %1108 = vperm.xlu0 %1107, %v1077
    %v1109 = vpop.permute.xlu0 %1108
    %1112 = vset.pattern.permute.xlu0 0
    %1113 = vperm.xlu0 %1112, %v1078
    %v1114 = vpop.permute.xlu0 %1113
    %1117 = vset.pattern.permute.xlu0 0
    %1118 = vperm.xlu0 %1117, %v1079
    %v1119 = vpop.permute.xlu0 %1118
    %1122 = vset.pattern.permute.xlu0 0
    %1123 = vperm.xlu0 %1122, %v1080
    %v1124 = vpop.permute.xlu0 %1123
    %1127 = vset.pattern.permute.xlu0 0
    %1128 = vperm.xlu0 %1127, %v1081
    %v1129 = vpop.permute.xlu0 %1128
    %1132 = vset.pattern.permute.xlu0 0
    %1133 = vperm.xlu0 %1132, %v1082
    %v1134 = vpop.permute.xlu0 %1133
    %1137 = vset.pattern.permute.xlu0 0
    %1138 = vperm.xlu0 %1137, %v1083
    %v1139 = vpop.permute.xlu0 %1138
    %1142 = vset.pattern.permute.xlu0 0
    %1143 = vperm.xlu0 %1142, %v1084
    %v1144 = vpop.permute.xlu0 %1143
    %1147 = vset.pattern.permute.xlu0 0
    %1148 = vperm.xlu0 %1147, %v1085
    %v1149 = vpop.permute.xlu0 %1148
    %1152 = vset.pattern.permute.xlu0 0
    %1153 = vperm.xlu0 %1152, %v1086
    %v1154 = vpop.permute.xlu0 %1153
    %1157 = vset.pattern.permute.xlu0 0
    %1158 = vperm.xlu0 %1157, %v1087
    %v1159 = vpop.permute.xlu0 %1158
    %1162 = vset.pattern.permute.xlu0 0
    %1163 = vperm.xlu0 %1162, %v1088
    %v1164 = vpop.permute.xlu0 %1163
    %1167 = vset.pattern.permute.xlu0 0
    %1168 = vperm.xlu0 %1167, %v1089
    %v1169 = vpop.permute.xlu0 %1168
    %v1172 = vperm.slane %v1090, 0
    %v1174 = vmul.f32 %v1094, %v1172
    %v1175 = vmul.f32 %v1099, %v1172
    %v1176 = vmul.f32 %v1104, %v1172
    %v1177 = vmul.f32 %v1109, %v1172
    %v1178 = vmul.f32 %v1114, %v1172
    %v1179 = vmul.f32 %v1119, %v1172
    %v1180 = vmul.f32 %v1124, %v1172
    %v1181 = vmul.f32 %v1129, %v1172
    %v1182 = vmul.f32 %v1134, %v1172
    %v1183 = vmul.f32 %v1139, %v1172
    %v1184 = vmul.f32 %v1144, %v1172
    %v1185 = vmul.f32 %v1149, %v1172
    %v1186 = vmul.f32 %v1154, %v1172
    %v1187 = vmul.f32 %v1159, %v1172
    %v1188 = vmul.f32 %v1164, %v1172
    %v1189 = vmul.f32 %v1169, %v1172
    %v1190 = vpack.c.bf16 %v1043, %v1042
    %v1191 = vpack.c.bf16 %v1045, %v1044
    %v1192 = vpack.c.bf16 %v1047, %v1046
    %v1193 = vpack.c.bf16 %v1049, %v1048
    %v1194 = vpack.c.bf16 %v1051, %v1050
    %v1195 = vpack.c.bf16 %v1053, %v1052
    %v1196 = vpack.c.bf16 %v1055, %v1054
    %v1197 = vpack.c.bf16 %v1057, %v1056
    %v1198 = vld [vmem:[%s10] sm:$0xf]
    %v1199 = vld [vmem:[%s10 + $0x4] sm:$0xf]
    %v1200 = vld [vmem:[%s10 + $0x8] sm:$0xf]
    %v1201 = vld [vmem:[%s10 + $0xc] sm:$0xf]
    %v1206 = vunpack.c.l.b16 %v1198
    %v1207 = vunpack.c.l.b16 %v1199
    %v1208 = vunpack.c.l.b16 %v1200
    %v1209 = vunpack.c.l.b16 %v1201
    %v1210 = vpack.c.b16 %v1207, %v1206
    %v1211 = vpack.c.b16 %v1209, %v1208
    %v1215 = vsel %vm443, %v1190, 0
    %v1218 = vsel %vm443, %v1191, 0
    %v1221 = vsel %vm443, %v1192, 0
    %v1224 = vsel %vm443, %v1193, 0
    %v1227 = vsel %vm443, %v1194, 0
    %v1230 = vsel %vm443, %v1195, 0
    %v1233 = vsel %vm443, %v1196, 0
    %v1236 = vsel %vm443, %v1197, 0
    %1238 = vmatpush.bf16.msra.mxu0 0
    %1239 = vmatpush.bf16.msra.mxu0 0
    %1240 = vmatpush.bf16.msra.mxu0 0
    %1241 = vmatpush.bf16.msra.mxu0 0
    %1242 = vmatpush.bf16.msra.mxu0 0
    %1243 = vmatpush.bf16.msra.mxu0 0
    %1244 = vmatpush.bf16.msra.mxu0 %v1211
    %1245 = vmatpush.bf16.msra.mxu0 %v1210
    %1246 = vmatmul.bf16.gmra.mxu0 %v1215
    %v1247 = vpop.f32.mrf.mxu0
    %v1248 = vadd.f32 0.0, %v1247
    %v1249 = vpop.f32.mrf.mxu0
    %v1250 = vadd.f32 0.0, %v1249
    %1251 = vmatmul.bf16.gmra.mxu0 %v1218
    %v1252 = vpop.f32.mrf.mxu0
    %v1253 = vadd.f32 0.0, %v1252
    %v1254 = vpop.f32.mrf.mxu0
    %v1255 = vadd.f32 0.0, %v1254
    %1256 = vmatmul.bf16.gmra.mxu0 %v1221
    %v1257 = vpop.f32.mrf.mxu0
    %v1258 = vadd.f32 0.0, %v1257
    %v1259 = vpop.f32.mrf.mxu0
    %v1260 = vadd.f32 0.0, %v1259
    %1261 = vmatmul.bf16.gmra.mxu0 %v1224
    %v1262 = vpop.f32.mrf.mxu0
    %v1263 = vadd.f32 0.0, %v1262
    %v1264 = vpop.f32.mrf.mxu0
    %v1265 = vadd.f32 0.0, %v1264
    %1266 = vmatmul.bf16.gmra.mxu0 %v1227
    %v1267 = vpop.f32.mrf.mxu0
    %v1268 = vadd.f32 0.0, %v1267
    %v1269 = vpop.f32.mrf.mxu0
    %v1270 = vadd.f32 0.0, %v1269
    %1271 = vmatmul.bf16.gmra.mxu0 %v1230
    %v1272 = vpop.f32.mrf.mxu0
    %v1273 = vadd.f32 0.0, %v1272
    %v1274 = vpop.f32.mrf.mxu0
    %v1275 = vadd.f32 0.0, %v1274
    %1276 = vmatmul.bf16.gmra.mxu0 %v1233
    %v1277 = vpop.f32.mrf.mxu0
    %v1278 = vadd.f32 0.0, %v1277
    %v1279 = vpop.f32.mrf.mxu0
    %v1280 = vadd.f32 0.0, %v1279
    %1281 = vmatmul.bf16.gmra.mxu0 %v1236
    %v1282 = vpop.f32.mrf.mxu0
    %v1283 = vadd.f32 0.0, %v1282
    %v1284 = vpop.f32.mrf.mxu0
    %v1285 = vadd.f32 0.0, %v1284
    %1286 = vdwg.mxu0
    %v1287 = vadd.f32 %v1174, %v1248
    %v1288 = vadd.f32 %v1175, %v1250
    %v1289 = vadd.f32 %v1176, %v1253
    %v1290 = vadd.f32 %v1177, %v1255
    %v1291 = vadd.f32 %v1178, %v1258
    %v1292 = vadd.f32 %v1179, %v1260
    %v1293 = vadd.f32 %v1180, %v1263
    %v1294 = vadd.f32 %v1181, %v1265
    %v1295 = vadd.f32 %v1182, %v1268
    %v1296 = vadd.f32 %v1183, %v1270
    %v1297 = vadd.f32 %v1184, %v1273
    %v1298 = vadd.f32 %v1185, %v1275
    %v1299 = vadd.f32 %v1186, %v1278
    %v1300 = vadd.f32 %v1187, %v1280
    %v1301 = vadd.f32 %v1188, %v1283
    %v1302 = vadd.f32 %v1189, %v1285
    %v1303 = vld [vmem:[%s11] sm:$0x1]
    %v1305 = vperm.slane %v1303, 0
    %v1307 = vadd.f32 %v1287, %v1305
    %v1308 = vadd.f32 %v1288, %v1305
    %v1309 = vadd.f32 %v1289, %v1305
    %v1310 = vadd.f32 %v1290, %v1305
    %v1311 = vadd.f32 %v1291, %v1305
    %v1312 = vadd.f32 %v1292, %v1305
    %v1313 = vadd.f32 %v1293, %v1305
    %v1314 = vadd.f32 %v1294, %v1305
    %v1315 = vadd.f32 %v1295, %v1305
    %v1316 = vadd.f32 %v1296, %v1305
    %v1317 = vadd.f32 %v1297, %v1305
    %v1318 = vadd.f32 %v1298, %v1305
    %v1319 = vadd.f32 %v1299, %v1305
    %v1320 = vadd.f32 %v1300, %v1305
    %v1321 = vadd.f32 %v1301, %v1305
    %v1322 = vadd.f32 %v1302, %v1305
    %v1323 = vmul.f32 %v1307, 0.5
    %v1324 = vmul.f32 %v1308, 0.5
    %v1325 = vmul.f32 %v1309, 0.5
    %v1326 = vmul.f32 %v1310, 0.5
    %v1327 = vmul.f32 %v1311, 0.5
    %v1328 = vmul.f32 %v1312, 0.5
    %v1329 = vmul.f32 %v1313, 0.5
    %v1330 = vmul.f32 %v1314, 0.5
    %v1331 = vmul.f32 %v1315, 0.5
    %v1332 = vmul.f32 %v1316, 0.5
    %v1333 = vmul.f32 %v1317, 0.5
    %v1334 = vmul.f32 %v1318, 0.5
    %v1335 = vmul.f32 %v1319, 0.5
    %v1336 = vmul.f32 %v1320, 0.5
    %v1337 = vmul.f32 %v1321, 0.5
    %v1338 = vmul.f32 %v1322, 0.5
    %v1339 = vtanh.pop %v1323
    %v1340 = vtanh.pop %v1324
    %v1341 = vtanh.pop %v1325
    %v1342 = vtanh.pop %v1326
    %v1343 = vtanh.pop %v1327
    %v1344 = vtanh.pop %v1328
    %v1345 = vtanh.pop %v1329
    %v1346 = vtanh.pop %v1330
    %v1347 = vtanh.pop %v1331
    %v1348 = vtanh.pop %v1332
    %v1349 = vtanh.pop %v1333
    %v1350 = vtanh.pop %v1334
    %v1351 = vtanh.pop %v1335
    %v1352 = vtanh.pop %v1336
    %v1353 = vtanh.pop %v1337
    %v1354 = vtanh.pop %v1338
    %v1355 = vmul.f32 %v1339, 0.5
    %v1356 = vmul.f32 %v1340, 0.5
    %v1357 = vmul.f32 %v1341, 0.5
    %v1358 = vmul.f32 %v1342, 0.5
    %v1359 = vmul.f32 %v1343, 0.5
    %v1360 = vmul.f32 %v1344, 0.5
    %v1361 = vmul.f32 %v1345, 0.5
    %v1362 = vmul.f32 %v1346, 0.5
    %v1363 = vmul.f32 %v1347, 0.5
    %v1364 = vmul.f32 %v1348, 0.5
    %v1365 = vmul.f32 %v1349, 0.5
    %v1366 = vmul.f32 %v1350, 0.5
    %v1367 = vmul.f32 %v1351, 0.5
    %v1368 = vmul.f32 %v1352, 0.5
    %v1369 = vmul.f32 %v1353, 0.5
    %v1370 = vmul.f32 %v1354, 0.5
    %v1371 = vadd.f32 %v1355, 0.5
    %v1372 = vadd.f32 %v1356, 0.5
    %v1373 = vadd.f32 %v1357, 0.5
    %v1374 = vadd.f32 %v1358, 0.5
    %v1375 = vadd.f32 %v1359, 0.5
    %v1376 = vadd.f32 %v1360, 0.5
    %v1377 = vadd.f32 %v1361, 0.5
    %v1378 = vadd.f32 %v1362, 0.5
    %v1379 = vadd.f32 %v1363, 0.5
    %v1380 = vadd.f32 %v1364, 0.5
    %v1381 = vadd.f32 %v1365, 0.5
    %v1382 = vadd.f32 %v1366, 0.5
    %v1383 = vadd.f32 %v1367, 0.5
    %v1384 = vadd.f32 %v1368, 0.5
    %v1385 = vadd.f32 %v1369, 0.5
    %v1386 = vadd.f32 %v1370, 0.5
    %v1387 = vmul.f32 %v1307, %v1371
    %v1388 = vmul.f32 %v1308, %v1372
    %v1389 = vmul.f32 %v1309, %v1373
    %v1390 = vmul.f32 %v1310, %v1374
    %v1391 = vmul.f32 %v1311, %v1375
    %v1392 = vmul.f32 %v1312, %v1376
    %v1393 = vmul.f32 %v1313, %v1377
    %v1394 = vmul.f32 %v1314, %v1378
    %v1395 = vmul.f32 %v1315, %v1379
    %v1396 = vmul.f32 %v1316, %v1380
    %v1397 = vmul.f32 %v1317, %v1381
    %v1398 = vmul.f32 %v1318, %v1382
    %v1399 = vmul.f32 %v1319, %v1383
    %v1400 = vmul.f32 %v1320, %v1384
    %v1401 = vmul.f32 %v1321, %v1385
    %v1402 = vmul.f32 %v1322, %v1386
    %v1403 = vpack.c.bf16 %v1388, %v1387
    %v1404 = vpack.c.bf16 %v1390, %v1389
    %v1405 = vpack.c.bf16 %v1392, %v1391
    %v1406 = vpack.c.bf16 %v1394, %v1393
    %v1407 = vpack.c.bf16 %v1396, %v1395
    %v1408 = vpack.c.bf16 %v1398, %v1397
    %v1409 = vpack.c.bf16 %v1400, %v1399
    %v1410 = vpack.c.bf16 %v1402, %v1401
    %v1411 = vld [vmem:[%s12] sm:$0xf]
    %v1412 = vld [vmem:[%s12 + $0x4] sm:$0xf]
    %v1413 = vld [vmem:[%s12 + $0x8] sm:$0xf]
    %v1414 = vld [vmem:[%s12 + $0xc] sm:$0xf]
    %v1415 = vld [vmem:[%s13] sm:$0x1]
    %v1417 = vperm.slane %v1415, 0
    %v1423 = vunpack.c.l.b16 %v1411
    %v1424 = vunpack.c.l.b16 %v1412
    %v1425 = vunpack.c.l.b16 %v1413
    %v1426 = vunpack.c.l.b16 %v1414
    %v1427 = vpack.c.b16 %v1424, %v1423
    %v1428 = vpack.c.b16 %v1426, %v1425
    %v1432 = vsel %vm443, %v1403, 0
    %v1435 = vsel %vm443, %v1404, 0
    %v1438 = vsel %vm443, %v1405, 0
    %v1441 = vsel %vm443, %v1406, 0
    %v1444 = vsel %vm443, %v1407, 0
    %v1447 = vsel %vm443, %v1408, 0
    %v1450 = vsel %vm443, %v1409, 0
    %v1453 = vsel %vm443, %v1410, 0
    %1455 = vmatpush.bf16.msra.mxu0 0
    %1456 = vmatpush.bf16.msra.mxu0 0
    %1457 = vmatpush.bf16.msra.mxu0 0
    %1458 = vmatpush.bf16.msra.mxu0 0
    %1459 = vmatpush.bf16.msra.mxu0 0
    %1460 = vmatpush.bf16.msra.mxu0 0
    %1461 = vmatpush.bf16.msra.mxu0 %v1428
    %1462 = vmatpush.bf16.msra.mxu0 %v1427
    %1463 = vmatmul.bf16.gmra.mxu0 %v1432
    %v1464 = vpop.f32.mrf.mxu0
    %v1465 = vadd.f32 %v1417, %v1464
    %v1466 = vpop.f32.mrf.mxu0
    %v1467 = vadd.f32 %v1417, %v1466
    %1468 = vmatmul.bf16.gmra.mxu0 %v1435
    %v1469 = vpop.f32.mrf.mxu0
    %v1470 = vadd.f32 %v1417, %v1469
    %v1471 = vpop.f32.mrf.mxu0
    %v1472 = vadd.f32 %v1417, %v1471
    %1473 = vmatmul.bf16.gmra.mxu0 %v1438
    %v1474 = vpop.f32.mrf.mxu0
    %v1475 = vadd.f32 %v1417, %v1474
    %v1476 = vpop.f32.mrf.mxu0
    %v1477 = vadd.f32 %v1417, %v1476
    %1478 = vmatmul.bf16.gmra.mxu0 %v1441
    %v1479 = vpop.f32.mrf.mxu0
    %v1480 = vadd.f32 %v1417, %v1479
    %v1481 = vpop.f32.mrf.mxu0
    %v1482 = vadd.f32 %v1417, %v1481
    %1483 = vmatmul.bf16.gmra.mxu0 %v1444
    %v1484 = vpop.f32.mrf.mxu0
    %v1485 = vadd.f32 %v1417, %v1484
    %v1486 = vpop.f32.mrf.mxu0
    %v1487 = vadd.f32 %v1417, %v1486
    %1488 = vmatmul.bf16.gmra.mxu0 %v1447
    %v1489 = vpop.f32.mrf.mxu0
    %v1490 = vadd.f32 %v1417, %v1489
    %v1491 = vpop.f32.mrf.mxu0
    %v1492 = vadd.f32 %v1417, %v1491
    %1493 = vmatmul.bf16.gmra.mxu0 %v1450
    %v1494 = vpop.f32.mrf.mxu0
    %v1495 = vadd.f32 %v1417, %v1494
    %v1496 = vpop.f32.mrf.mxu0
    %v1497 = vadd.f32 %v1417, %v1496
    %1498 = vmatmul.bf16.gmra.mxu0 %v1453
    %v1499 = vpop.f32.mrf.mxu0
    %v1500 = vadd.f32 %v1417, %v1499
    %v1501 = vpop.f32.mrf.mxu0
    %v1502 = vadd.f32 %v1417, %v1501
    %1503 = vdwg.mxu0
    %v1504 = vsub.f32 %v1465, %v1058
    %v1505 = vsub.f32 %v1467, %v1059
    %v1506 = vsub.f32 %v1470, %v1060
    %v1507 = vsub.f32 %v1472, %v1061
    %v1508 = vsub.f32 %v1475, %v1062
    %v1509 = vsub.f32 %v1477, %v1063
    %v1510 = vsub.f32 %v1480, %v1064
    %v1511 = vsub.f32 %v1482, %v1065
    %v1512 = vsub.f32 %v1485, %v1066
    %v1513 = vsub.f32 %v1487, %v1067
    %v1514 = vsub.f32 %v1490, %v1068
    %v1515 = vsub.f32 %v1492, %v1069
    %v1516 = vsub.f32 %v1495, %v1070
    %v1517 = vsub.f32 %v1497, %v1071
    %v1518 = vsub.f32 %v1500, %v1072
    %v1519 = vsub.f32 %v1502, %v1073
    %v1520 = vmul.f32 %v1504, %v1504
    %v1521 = vmul.f32 %v1505, %v1505
    %v1522 = vmul.f32 %v1506, %v1506
    %v1523 = vmul.f32 %v1507, %v1507
    %v1524 = vmul.f32 %v1508, %v1508
    %v1525 = vmul.f32 %v1509, %v1509
    %v1526 = vmul.f32 %v1510, %v1510
    %v1527 = vmul.f32 %v1511, %v1511
    %v1528 = vmul.f32 %v1512, %v1512
    %v1529 = vmul.f32 %v1513, %v1513
    %v1530 = vmul.f32 %v1514, %v1514
    %v1531 = vmul.f32 %v1515, %v1515
    %v1532 = vmul.f32 %v1516, %v1516
    %v1533 = vmul.f32 %v1517, %v1517
    %v1534 = vmul.f32 %v1518, %v1518
    %v1535 = vmul.f32 %v1519, %v1519
    %1536 = vset.pattern.permute.xlu0 1
    %1537 = vperm.xlu0 %1536, %v1074
    %v1538 = vpop.permute.xlu0 %1537
    %1540 = vset.pattern.permute.xlu0 1
    %1541 = vperm.xlu0 %1540, %v1075
    %v1542 = vpop.permute.xlu0 %1541
    %1544 = vset.pattern.permute.xlu0 1
    %1545 = vperm.xlu0 %1544, %v1076
    %v1546 = vpop.permute.xlu0 %1545
    %1548 = vset.pattern.permute.xlu0 1
    %1549 = vperm.xlu0 %1548, %v1077
    %v1550 = vpop.permute.xlu0 %1549
    %1552 = vset.pattern.permute.xlu0 1
    %1553 = vperm.xlu0 %1552, %v1078
    %v1554 = vpop.permute.xlu0 %1553
    %1556 = vset.pattern.permute.xlu0 1
    %1557 = vperm.xlu0 %1556, %v1079
    %v1558 = vpop.permute.xlu0 %1557
    %1560 = vset.pattern.permute.xlu0 1
    %1561 = vperm.xlu0 %1560, %v1080
    %v1562 = vpop.permute.xlu0 %1561
    %1564 = vset.pattern.permute.xlu0 1
    %1565 = vperm.xlu0 %1564, %v1081
    %v1566 = vpop.permute.xlu0 %1565
    %1568 = vset.pattern.permute.xlu0 1
    %1569 = vperm.xlu0 %1568, %v1082
    %v1570 = vpop.permute.xlu0 %1569
    %1572 = vset.pattern.permute.xlu0 1
    %1573 = vperm.xlu0 %1572, %v1083
    %v1574 = vpop.permute.xlu0 %1573
    %1576 = vset.pattern.permute.xlu0 1
    %1577 = vperm.xlu0 %1576, %v1084
    %v1578 = vpop.permute.xlu0 %1577
    %1580 = vset.pattern.permute.xlu0 1
    %1581 = vperm.xlu0 %1580, %v1085
    %v1582 = vpop.permute.xlu0 %1581
    %1584 = vset.pattern.permute.xlu0 1
    %1585 = vperm.xlu0 %1584, %v1086
    %v1586 = vpop.permute.xlu0 %1585
    %1588 = vset.pattern.permute.xlu0 1
    %1589 = vperm.xlu0 %1588, %v1087
    %v1590 = vpop.permute.xlu0 %1589
    %1592 = vset.pattern.permute.xlu0 1
    %1593 = vperm.xlu0 %1592, %v1088
    %v1594 = vpop.permute.xlu0 %1593
    %1596 = vset.pattern.permute.xlu0 1
    %1597 = vperm.xlu0 %1596, %v1089
    %v1598 = vpop.permute.xlu0 %1597
    %v1600 = vmul.f32 %v1520, %v1538
    %v1601 = vmul.f32 %v1521, %v1542
    %v1602 = vmul.f32 %v1522, %v1546
    %v1603 = vmul.f32 %v1523, %v1550
    %v1604 = vmul.f32 %v1524, %v1554
    %v1605 = vmul.f32 %v1525, %v1558
    %v1606 = vmul.f32 %v1526, %v1562
    %v1607 = vmul.f32 %v1527, %v1566
    %v1608 = vmul.f32 %v1528, %v1570
    %v1609 = vmul.f32 %v1529, %v1574
    %v1610 = vmul.f32 %v1530, %v1578
    %v1611 = vmul.f32 %v1531, %v1582
    %v1612 = vmul.f32 %v1532, %v1586
    %v1613 = vmul.f32 %v1533, %v1590
    %v1614 = vmul.f32 %v1534, %v1594
    %v1615 = vmul.f32 %v1535, %v1598
    %v1617 = vsel %vm443, 0.015625, 0
    %v1620 = vsel %vm443, %v1600, 0
    %v1623 = vsel %vm443, %v1601, 0
    %v1626 = vsel %vm443, %v1602, 0
    %v1629 = vsel %vm443, %v1603, 0
    %v1632 = vsel %vm443, %v1604, 0
    %v1635 = vsel %vm443, %v1605, 0
    %v1638 = vsel %vm443, %v1606, 0
    %v1641 = vsel %vm443, %v1607, 0
    %v1644 = vsel %vm443, %v1608, 0
    %v1647 = vsel %vm443, %v1609, 0
    %v1650 = vsel %vm443, %v1610, 0
    %v1653 = vsel %vm443, %v1611, 0
    %v1656 = vsel %vm443, %v1612, 0
    %v1659 = vsel %vm443, %v1613, 0
    %v1662 = vsel %vm443, %v1614, 0
    %v1665 = vsel %vm443, %v1615, 0
    %1667 = vmatpush.xpose.msra.mxu0 %v1665
    %1668 = vmatpush.xpose.msra.mxu0 %v1662
    %1669 = vmatpush.xpose.msra.mxu0 %v1659
    %1670 = vmatpush.xpose.msra.mxu0 %v1656
    %1671 = vmatpush.xpose.msra.mxu0 %v1653
    %1672 = vmatpush.xpose.msra.mxu0 %v1650
    %1673 = vmatpush.xpose.msra.mxu0 %v1647
    %1674 = vmatpush.xpose.msra.mxu0 %v1644
    %1675 = vmatpush.xpose.msra.mxu0 %v1641
    %1676 = vmatpush.xpose.msra.mxu0 %v1638
    %1677 = vmatpush.xpose.msra.mxu0 %v1635
    %1678 = vmatpush.xpose.msra.mxu0 %v1632
    %1679 = vmatpush.xpose.msra.mxu0 %v1629
    %1680 = vmatpush.xpose.msra.mxu0 %v1626
    %1681 = vmatpush.xpose.msra.mxu0 %v1623
    %1682 = vmatpush.xpose.msra.mxu0 %v1620
    %1683 = vmatmul.f32.gmra.mxu0 %v1617
    %v1684 = vpop.f32.mrf.mxu0
    %v1685 = vadd.f32 0.0, %v1684
    %1686 = vdwg.mxu0
    %1687 = vst [vmem:[#allocation2] sm:$0x1] %v1685
    // Predicated region
    $region58: #{tpu_custom_call.1} parent=1 // pred_check
      _
    $region59: #{tpu_custom_call.1} parent=1 // pred_check_branch
      %1689 = sbr.rel (0) target = $region61
    $region60: #{tpu_custom_call.1} parent=1 // pred_region
      %1691 = vsyncadd [#allocation3], 0
      %s1693 = sshll.u32 [#allocation2], 4
      %s1694 = int_to_ptr.vmem [resolvable:$true] %s1693
      %s1695 = sshll.u32 %s14, 4
      %s1696 = int_to_ptr.hbm [resolvable:$true] %s1695
      %1698 = dma.vmem_to_hbm [thread:$0]  %s1694, 16, %s1696, [#allocation3]
    $region61: #{tpu_custom_call.1} parent=1 // pred_fallthru
      _
    // Predicated region
    $region62: #{tpu_custom_call.1} parent=1 // pred_check
      _
    $region63: #{tpu_custom_call.1} parent=1 // pred_check_branch
      %1700 = sbr.rel (0) target = $region65
    $region64: #{tpu_custom_call.1} parent=1 // pred_region
      %1702 = dma.done [#allocation3], 16
    $region65: #{tpu_custom_call.1} parent=1 // pred_fallthru
      _
    %1703 = vsyncpa [#allocation3], 1

</llo_original>
